<compile_context>
chip_gen: v7x
topology: tpu7x:2x2x1
jax: 0.10.0
libtpu: 0.0.40
codegen_flags: <defaults>
</compile_context>

<pallas_src>
import functools
import math

import jax
import jax.numpy as jnp
from jax.experimental import pallas as pl
from jax.experimental.pallas import tpu as pltpu


# ----------------------------- parameter init -------------------------------
def _uniform(key, shape, bound):
    return jax.random.uniform(key, shape, jnp.float32, -bound, bound)


def init_fc_params(key, in_channel, in_size):
    in_len = in_channel * in_size * in_size
    dims = [(in_len, 512), (512, 128), (128, in_size * in_size)]
    params = []
    for fan_in, fan_out in dims:
        key, kw, kb = jax.random.split(key, 3)
        bound = 1.0 / math.sqrt(fan_in)
        params += [_uniform(kw, (fan_in, fan_out), bound),
                   _uniform(kb, (1, fan_out), bound)]
    return tuple(params)


def init_conv_params(key, in_channel):
    # weight layout: 3x3 convs -> (kH, kW, Cin, Cout); 1x1 convs -> (Cin, Cout)
    defs = [(3, in_channel, 128), (1, 128, 128), (3, 128, 128), (1, 128, 1)]
    params = []
    for k, cin, cout in defs:
        key, kw, kb = jax.random.split(key, 3)
        bound = 1.0 / math.sqrt(cin * k * k)
        w_shape = (3, 3, cin, cout) if k == 3 else (cin, cout)
        params += [_uniform(kw, w_shape, bound), _uniform(kb, (1, cout), bound)]
    return tuple(params)


# ------------------------------- FC variant ----------------------------------
def _fc_kernel(x_ref, w1_ref, b1_ref, w2_ref, b2_ref, w3_ref, b3_ref, o_ref):
    x = x_ref[...]
    h1 = jnp.maximum(
        jnp.dot(x, w1_ref[...], preferred_element_type=jnp.float32) + b1_ref[...], 0.0)
    h2 = jnp.maximum(
        jnp.dot(h1, w2_ref[...], preferred_element_type=jnp.float32) + b2_ref[...], 0.0)
    # TODO(synk): nn.Dropout(p=0.5) is implemented as identity (inference
    # semantics); torch train-mode RNG masking is not replicated.
    o_ref[...] = (jnp.dot(h2, w3_ref[...], preferred_element_type=jnp.float32)
                  + b3_ref[...]).astype(o_ref.dtype)


def fc_forward(x_nchw, params):
    n = x_nchw.shape[0]
    x = x_nchw.reshape(n, -1).astype(jnp.float32)
    w1, b1, w2, b2, w3, b3 = params
    args = (x, w1, b1, w2, b2, w3, b3)
    out_dim = w3.shape[1]
    # At batch=2 this path is purely weight-DMA bound; advertise that to the
    # scheduler.  (bf16 weight compression was considered but skipped: it risks
    # the 1e-3 tolerance vs. the f32 torch reference.)
    flops = 2 * n * (w1.shape[0] * w1.shape[1]
                     + w2.shape[0] * w2.shape[1]
                     + w3.shape[0] * w3.shape[1])
    bytes_accessed = 4 * (x.size + sum(a.size for a in params) + n * out_dim)
    full = lambda a: pl.BlockSpec(a.shape, lambda _: (0,) * a.ndim)
    out = pl.pallas_call(
        _fc_kernel,
        out_shape=jax.ShapeDtypeStruct((n, out_dim), jnp.float32),
        grid=(1,),
        in_specs=[full(a) for a in args],
        out_specs=pl.BlockSpec((n, out_dim), lambda _: (0, 0)),
        cost_estimate=pl.CostEstimate(flops=flops, transcendentals=0,
                                      bytes_accessed=bytes_accessed),
        compiler_params=pltpu.CompilerParams(dimension_semantics=("arbitrary",)),
    )(*args)
    return out


# ------------------------------ Conv variant ---------------------------------
def _conv_kernel(p_ref, w1_ref, b1_ref, w2_ref, b2_ref, w3_ref, b3_ref,
                 w4_ref, b4_ref, o_ref, im2_ref, *, H, W, C):
    # All activations are (C, H*W): channels on sublanes, flat spatial on lanes.
    HW = H * W

    # conv1 (3x3, pad=1): ONE matmul on wrapper-side im2col patches.
    h1 = jnp.maximum(
        jnp.dot(w1_ref[...], p_ref[0], preferred_element_type=jnp.float32)
        + b1_ref[...], 0.0)                                    # (C, HW)

    # conv2 (1x1): plain matmul.
    h2 = jnp.maximum(
        jnp.dot(w2_ref[...], h1, preferred_element_type=jnp.float32)
        + b2_ref[...], 0.0)                                    # (C, HW)

    # conv3 (3x3, pad=1): build the (9*C, HW) im2col slab in a VMEM scratch.
    # Each spatial shift is a lane roll (XLU) of the flattened h2 plus a
    # boundary mask; every tap lands at a 128-aligned sublane offset.  Then a
    # single K=9*C matmul feeds the MXU.
    pos = jax.lax.broadcasted_iota(jnp.int32, (C, HW), 1)
    y = pos // W
    x = pos % W
    for dy in range(3):
        for dx in range(3):
            k = (dy - 1) * W + (dx - 1)
            shifted = h2 if k == 0 else pltpu.roll(h2, shift=(-k) % HW, axis=1)
            valid = ((y + dy >= 1) & (y + dy <= H) &
                     (x + dx >= 1) & (x + dx <= W))
            off = (dy * 3 + dx) * C
            im2_ref[off:off + C, :] = jnp.where(valid, shifted, 0.0)
    h3 = jnp.maximum(
        jnp.dot(w3_ref[...], im2_ref[...], preferred_element_type=jnp.float32)
        + b3_ref[...], 0.0)                                    # (C, HW)

    # conv4 (1x1 -> 1 channel): VPU multiply + sublane reduction, giving a
    # lane-dense (1, HW) row directly (no lane-sparse MXU column, no masked
    # partial stores).
    res = jnp.sum(h3 * w4_ref[...], axis=0, keepdims=True) + b4_ref[...]
    o_ref[...] = res.reshape(1, 1, HW).astype(o_ref.dtype)


def conv_forward(x_nchw, params):
    w1, b1, w2, b2, w3, b3, w4, b4 = params
    n, cin, hh, ww = x_nchw.shape
    hw = hh * ww
    C = w1.shape[3]

    # conv1 im2col in plain JAX (tiny), transposed so the flattened spatial
    # axis is the minor (lane) dim everywhere inside the kernel.
    x_nhwc = jnp.transpose(x_nchw, (0, 2, 3, 1)).astype(jnp.float32)
    x_pad = jnp.pad(x_nhwc, ((0, 0), (1, 1), (1, 1), (0, 0)))
    taps = [x_pad[:, dy:dy + hh, dx:dx + ww, :]
            for dy in range(3) for dx in range(3)]
    patches = jnp.concatenate(taps, axis=-1).reshape(n, hw, 9 * cin)
    patches_t = jnp.transpose(patches, (0, 2, 1))              # (N, 9*cin, HW)

    # Pre-transposed weights/biases (layout plumbing in the wrapper).
    w1t = w1.reshape(9 * cin, C).T                             # (C, 9*cin)
    w2t = w2.T                                                 # (C, C)
    w3t = w3.reshape(9 * C, C).T                               # (C, 9*C)
    b1t, b2t, b3t = b1.T, b2.T, b3.T                           # (C, 1)
    # w4 is already (C, 1); b4 is (1, 1).

    kernel = functools.partial(_conv_kernel, H=hh, W=ww, C=C)
    full = lambda a: pl.BlockSpec(a.shape, lambda b: (0,) * a.ndim)
    out = pl.pallas_call(
        kernel,
        out_shape=jax.ShapeDtypeStruct((n, 1, hw), jnp.float32),
        grid=(n,),   # batch stays a parallel grid axis (feeds both v7x TCs)
        in_specs=[
            pl.BlockSpec((1, 9 * cin, hw), lambda b: (b, 0, 0)),
            full(w1t), full(b1t), full(w2t), full(b2t),
            full(w3t), full(b3t), full(w4), full(b4),
        ],
        out_specs=pl.BlockSpec((1, 1, hw), lambda b: (b, 0, 0)),
        scratch_shapes=[pltpu.VMEM((9 * C, hw), jnp.float32)],
        compiler_params=pltpu.CompilerParams(dimension_semantics=("parallel",)),
    )(patches_t, w1t, b1t, w2t, b2t, w3t, b3t, w4, b4)
    # torch Conv2d output is NCHW with 1 channel: (N, 1, H, W)
    return out.reshape(n, 1, hh, ww)


# --------------------------- pure-JAX references ------------------------------
def fc_ref(x_nchw, params):
    w1, b1, w2, b2, w3, b3 = params
    x = x_nchw.reshape(x_nchw.shape[0], -1)
    h = jnp.maximum(x @ w1 + b1, 0.0)
    h = jnp.maximum(h @ w2 + b2, 0.0)
    return h @ w3 + b3


def conv_ref(x_nchw, params):
    w1, b1, w2, b2, w3, b3, w4, b4 = params
    x = jnp.transpose(x_nchw, (0, 2, 3, 1))
    dn = ('NHWC', 'HWIO', 'NHWC')
    h = jax.lax.conv_general_dilated(x, w1, (1, 1), 'SAME', dimension_numbers=dn)
    h = jnp.maximum(h + b1.reshape(1, 1, 1, -1), 0.0)
    h = jnp.maximum(jnp.einsum('nhwc,cd->nhwd', h, w2) + b2.reshape(1, 1, 1, -1), 0.0)
    h = jax.lax.conv_general_dilated(h, w3, (1, 1), 'SAME', dimension_numbers=dn)
    h = jnp.maximum(h + b3.reshape(1, 1, 1, -1), 0.0)
    h = jnp.einsum('nhwc,cd->nhwd', h, w4) + b4.reshape(1, 1, 1, -1)
    return jnp.transpose(h, (0, 3, 1, 2))


# ----------------------------------- main -------------------------------------
if __name__ == "__main__":
    in_channel, in_size, batch = 4, 16, 2
    x = jax.random.normal(jax.random.PRNGKey(0),
                          (batch, in_channel, in_size, in_size), jnp.float32)

    fc_params = init_fc_params(jax.random.PRNGKey(42), in_channel, in_size)
    conv_params = init_conv_params(jax.random.PRNGKey(43), in_channel)

    y_fc = jax.block_until_ready(fc_forward(x, fc_params))
    y_conv = jax.block_until_ready(conv_forward(x, conv_params))

    assert y_fc.shape == (batch, in_size * in_size)
    assert y_conv.shape == (batch, 1, in_size, in_size)
    assert jnp.allclose(y_fc, fc_ref(x, fc_params), atol=1e-3, rtol=1e-3)
    assert jnp.allclose(y_conv, conv_ref(x, conv_params), atol=1e-3, rtol=1e-3)

    print("KERNEL_OK")
</pallas_src>

<mosaic_0001>
module attributes {stable_mosaic.version = 11 : i64} {
  func.func @_fc_kernel(%arg0: i32, %arg1: memref<2x1024xf32, #tpu.memory_space<vmem>>, %arg2: memref<1024x512xf32, #tpu.memory_space<vmem>>, %arg3: memref<1x512xf32, #tpu.memory_space<vmem>>, %arg4: memref<512x128xf32, #tpu.memory_space<vmem>>, %arg5: memref<1x128xf32, #tpu.memory_space<vmem>>, %arg6: memref<128x256xf32, #tpu.memory_space<vmem>>, %arg7: memref<1x256xf32, #tpu.memory_space<vmem>>, %arg8: memref<2x256xf32, #tpu.memory_space<vmem>>) attributes {dimension_semantics = [#tpu.dimension_semantics<arbitrary>], iteration_bounds = array<i64: 1>, scalar_prefetch = 0 : i64, scratch_operands = 0 : i64, tpu.core_type = #tpu.core_type<tc>, window_params = [{pipeline_mode = #tpu.pipeline_mode<synchronous>, transform_indices = @transform_0, window_bounds = array<i64: 2, 1024>}, {pipeline_mode = #tpu.pipeline_mode<synchronous>, transform_indices = @transform_1, window_bounds = array<i64: 1024, 512>}, {pipeline_mode = #tpu.pipeline_mode<synchronous>, transform_indices = @transform_2, window_bounds = array<i64: 1, 512>}, {pipeline_mode = #tpu.pipeline_mode<synchronous>, transform_indices = @transform_3, window_bounds = array<i64: 512, 128>}, {pipeline_mode = #tpu.pipeline_mode<synchronous>, transform_indices = @transform_4, window_bounds = array<i64: 1, 128>}, {pipeline_mode = #tpu.pipeline_mode<synchronous>, transform_indices = @transform_5, window_bounds = array<i64: 128, 256>}, {pipeline_mode = #tpu.pipeline_mode<synchronous>, transform_indices = @transform_6, window_bounds = array<i64: 1, 256>}, {pipeline_mode = #tpu.pipeline_mode<synchronous>, transform_indices = @transform_7, window_bounds = array<i64: 2, 256>}]} {
    %c0 = arith.constant 0 : index
    %c0_0 = arith.constant 0 : index
    %0 = vector.load %arg1[%c0, %c0_0] : memref<2x1024xf32, #tpu.memory_space<vmem>>, vector<2x1024xf32>
    %c0_1 = arith.constant 0 : index
    %c0_2 = arith.constant 0 : index
    %1 = vector.load %arg2[%c0_1, %c0_2] : memref<1024x512xf32, #tpu.memory_space<vmem>>, vector<1024x512xf32>
    %cst = arith.constant dense<0.000000e+00> : vector<2x512xf32>
    %2 = tpu.matmul %0, %1, %cst {dimension_numbers = #tpu.dot_dimension_numbers<[1], [0], [0], [1], [0, 0, 1, 1], [], []>} : vector<2x1024xf32>, vector<1024x512xf32>, vector<2x512xf32> -> vector<2x512xf32>
    %c0_3 = arith.constant 0 : index
    %c0_4 = arith.constant 0 : index
    %3 = vector.load %arg3[%c0_3, %c0_4] : memref<1x512xf32, #tpu.memory_space<vmem>>, vector<1x512xf32>
    %4 = vector.broadcast %3 : vector<1x512xf32> to vector<2x512xf32>
    %5 = arith.addf %2, %4 : vector<2x512xf32>
    %cst_5 = arith.constant 0.000000e+00 : f32
    %6 = vector.broadcast %cst_5 : f32 to vector<2x512xf32>
    %7 = arith.maximumf %5, %6 : vector<2x512xf32>
    %c0_6 = arith.constant 0 : index
    %c0_7 = arith.constant 0 : index
    %8 = vector.load %arg4[%c0_6, %c0_7] : memref<512x128xf32, #tpu.memory_space<vmem>>, vector<512x128xf32>
    %cst_8 = arith.constant dense<0.000000e+00> : vector<2x128xf32>
    %9 = tpu.matmul %7, %8, %cst_8 {dimension_numbers = #tpu.dot_dimension_numbers<[1], [0], [0], [1], [0, 0, 1, 1], [], []>} : vector<2x512xf32>, vector<512x128xf32>, vector<2x128xf32> -> vector<2x128xf32>
    %c0_9 = arith.constant 0 : index
    %c0_10 = arith.constant 0 : index
    %10 = vector.load %arg5[%c0_9, %c0_10] : memref<1x128xf32, #tpu.memory_space<vmem>>, vector<1x128xf32>
    %11 = vector.broadcast %10 : vector<1x128xf32> to vector<2x128xf32>
    %12 = arith.addf %9, %11 : vector<2x128xf32>
    %cst_11 = arith.constant 0.000000e+00 : f32
    %13 = vector.broadcast %cst_11 : f32 to vector<2x128xf32>
    %14 = arith.maximumf %12, %13 : vector<2x128xf32>
    %c0_12 = arith.constant 0 : index
    %c0_13 = arith.constant 0 : index
    %15 = vector.load %arg6[%c0_12, %c0_13] : memref<128x256xf32, #tpu.memory_space<vmem>>, vector<128x256xf32>
    %cst_14 = arith.constant dense<0.000000e+00> : vector<2x256xf32>
    %16 = tpu.matmul %14, %15, %cst_14 {dimension_numbers = #tpu.dot_dimension_numbers<[1], [0], [0], [1], [0, 0, 1, 1], [], []>} : vector<2x128xf32>, vector<128x256xf32>, vector<2x256xf32> -> vector<2x256xf32>
    %c0_15 = arith.constant 0 : index
    %c0_16 = arith.constant 0 : index
    %17 = vector.load %arg7[%c0_15, %c0_16] : memref<1x256xf32, #tpu.memory_space<vmem>>, vector<1x256xf32>
    %18 = vector.broadcast %17 : vector<1x256xf32> to vector<2x256xf32>
    %19 = arith.addf %16, %18 : vector<2x256xf32>
    %c0_17 = arith.constant 0 : index
    %c0_18 = arith.constant 0 : index
    %20 = vector.load %arg8[%c0_17, %c0_18] : memref<2x256xf32, #tpu.memory_space<vmem>>, vector<2x256xf32>
    tpu.vector_store %arg8[%c0_17, %c0_18], %19 {strides = array<i32>} : memref<2x256xf32, #tpu.memory_space<vmem>>, vector<2x256xf32>,
    return
  }
  func.func @transform_0(%arg0: i32) -> (i32, i32) {
    %c0_i32 = arith.constant 0 : i32
    %c0_i32_0 = arith.constant 0 : i32
    %c0_i32_1 = arith.constant 0 : i32
    return %c0_i32, %c0_i32_0 : i32, i32
  }
  func.func @transform_1(%arg0: i32) -> (i32, i32) {
    %c0_i32 = arith.constant 0 : i32
    %c0_i32_0 = arith.constant 0 : i32
    %c0_i32_1 = arith.constant 0 : i32
    return %c0_i32, %c0_i32_0 : i32, i32
  }
  func.func @transform_2(%arg0: i32) -> (i32, i32) {
    %c0_i32 = arith.constant 0 : i32
    %c0_i32_0 = arith.constant 0 : i32
    %c0_i32_1 = arith.constant 0 : i32
    return %c0_i32, %c0_i32_0 : i32, i32
  }
  func.func @transform_3(%arg0: i32) -> (i32, i32) {
    %c0_i32 = arith.constant 0 : i32
    %c0_i32_0 = arith.constant 0 : i32
    %c0_i32_1 = arith.constant 0 : i32
    return %c0_i32, %c0_i32_0 : i32, i32
  }
  func.func @transform_4(%arg0: i32) -> (i32, i32) {
    %c0_i32 = arith.constant 0 : i32
    %c0_i32_0 = arith.constant 0 : i32
    %c0_i32_1 = arith.constant 0 : i32
    return %c0_i32, %c0_i32_0 : i32, i32
  }
  func.func @transform_5(%arg0: i32) -> (i32, i32) {
    %c0_i32 = arith.constant 0 : i32
    %c0_i32_0 = arith.constant 0 : i32
    %c0_i32_1 = arith.constant 0 : i32
    return %c0_i32, %c0_i32_0 : i32, i32
  }
  func.func @transform_6(%arg0: i32) -> (i32, i32) {
    %c0_i32 = arith.constant 0 : i32
    %c0_i32_0 = arith.constant 0 : i32
    %c0_i32_1 = arith.constant 0 : i32
    return %c0_i32, %c0_i32_0 : i32, i32
  }
  func.func @transform_7(%arg0: i32) -> (i32, i32) {
    %c0_i32 = arith.constant 0 : i32
    %c0_i32_0 = arith.constant 0 : i32
    %c0_i32_1 = arith.constant 0 : i32
    return %c0_i32, %c0_i32_0 : i32, i32
  }
}

</mosaic_0001>

<llo_original>
// kernel: tpu_custom_call.1
$region0: #{tpu_custom_call.1}
  #allocation0 [shape = 'u32[]', space=smem, size = 0x4, offset = 0x4, fixed_abs, tag = 'smem constant byte address 0x4 - core index']
  #allocation1 [shape = 'u32[144,128]{1,0:T(1,128)}', space=vmem, size = 0x12000, scoped, tag = 'internal scratch']
  %s0 = inlined_call_operand.hbm [shape: f32[2,1024], index: 0, kind: input, shape index: {}]
  %s1 = inlined_call_operand.hbm [shape: f32[1024,512], index: 1, kind: input, shape index: {}]
  %s2 = inlined_call_operand.hbm [shape: f32[1,512], index: 2, kind: input, shape index: {}]
  %s3 = inlined_call_operand.hbm [shape: f32[512,128], index: 3, kind: input, shape index: {}]
  %s4 = inlined_call_operand.hbm [shape: f32[1,128], index: 4, kind: input, shape index: {}]
  %s5 = inlined_call_operand.hbm [shape: f32[128,256], index: 5, kind: input, shape index: {}]
  %s6 = inlined_call_operand.hbm [shape: f32[1,256], index: 6, kind: input, shape index: {}]
  %s7 = inlined_call_operand.hbm [shape: f32[2,256], index: 7, kind: output, shape index: {}]
  %s8 = sld [smem:[#allocation0]]
  $region66: #{tpu_custom_call.1} parent=0
    _
  %s10 = ssub.s32 1, %s8
  %s11 = scalar_select 0, %s10, %s8
  $region1: #{tpu_custom_call.1} parent=0
    #allocation2 [shape = 'u8[8192]{0}', space=vmem, size = 0x2000, scoped, tag = 'input window, operand 0, single buffered']
    #allocation3 [shape = 's32[1]{0}', space=sflag, size = 0x4, scoped, tag = 'scoped memory for tpu_custom_call.1']
    #allocation4 [shape = 's32[1]{0}', space=sflag, size = 0x4, scoped, tag = 'scoped memory for tpu_custom_call.1']
    #allocation5 [shape = 'u8[2097152]{0}', space=vmem, size = 0x200000, scoped, tag = 'input window, operand 1, single buffered']
    #allocation6 [shape = 's32[1]{0}', space=sflag, size = 0x4, scoped, tag = 'scoped memory for tpu_custom_call.1']
    #allocation7 [shape = 'u8[2048]{0}', space=vmem, size = 0x800, scoped, tag = 'input window, operand 2, single buffered']
    #allocation8 [shape = 'u8[262144]{0}', space=vmem, size = 0x40000, scoped, tag = 'input window, operand 3, single buffered']
    #allocation9 [shape = 's32[1]{0}', space=sflag, size = 0x4, scoped, tag = 'scoped memory for tpu_custom_call.1']
    #allocation10 [shape = 'u8[512]{0}', space=vmem, size = 0x400, scoped, tag = 'input window, operand 4, single buffered']
    #allocation11 [shape = 'u8[131072]{0}', space=vmem, size = 0x20000, scoped, tag = 'input window, operand 5, single buffered']
    #allocation12 [shape = 's32[1]{0}', space=sflag, size = 0x4, scoped, tag = 'scoped memory for tpu_custom_call.1']
    #allocation13 [shape = 'u8[1024]{0}', space=vmem, size = 0x400, scoped, tag = 'input window, operand 6, single buffered']
    #allocation14 [shape = 'u8[2048]{0}', space=vmem, size = 0x800, scoped, tag = 'output window, operand 0, single buffered']
    %12 = vsyncpa [#allocation3], 0
    %13 = vsyncpa [#allocation6], 0
    %14 = vsyncpa [#allocation9], 0
    %15 = vsyncpa [#allocation12], 0
    %16 = vsyncpa [#allocation4], 0
    // Predicated region
    $region2: #{tpu_custom_call.1} parent=1 // pred_check
      _
    $region3: #{tpu_custom_call.1} parent=1 // pred_check_branch
      %18 = sbr.rel (0) target = $region5
    $region4: #{tpu_custom_call.1} parent=1 // pred_region
      %s20 = ssub.s32 256, 256
      %21 = vsyncadd [#allocation3], %s20
      %s23 = sshll.u32 [#allocation2], 4
      %s24 = int_to_ptr.vmem [resolvable:$true] %s23
      %26 = dma.hbm_to_vmem [thread:$0]  %s0, 256, %s24, [#allocation3]
    $region5: #{tpu_custom_call.1} parent=1 // pred_fallthru
      _
    // Predicated region
    $region6: #{tpu_custom_call.1} parent=1 // pred_check
      _
    $region7: #{tpu_custom_call.1} parent=1 // pred_check_branch
      %28 = sbr.rel (0) target = $region9
    $region8: #{tpu_custom_call.1} parent=1 // pred_region
      %s30 = ssub.s32 65536, 65536
      %31 = vsyncadd [#allocation6], %s30
      %s32 = sshll.u32 [#allocation5], 4
      %s33 = int_to_ptr.vmem [resolvable:$true] %s32
      %38 = dma.hbm_to_vmem [thread:$0]  %s1, 65536, %s33, [#allocation6], 512, 512, 32
    $region9: #{tpu_custom_call.1} parent=1 // pred_fallthru
      _
    // Predicated region
    $region10: #{tpu_custom_call.1} parent=1 // pred_check
      _
    $region11: #{tpu_custom_call.1} parent=1 // pred_check_branch
      %40 = sbr.rel (0) target = $region13
    $region12: #{tpu_custom_call.1} parent=1 // pred_region
      %s42 = ssub.s32 64, 64
      %43 = vsyncadd [#allocation6], %s42
      %s45 = sshll.u32 [#allocation7], 4
      %s46 = int_to_ptr.vmem [resolvable:$true] %s45
      %48 = dma.hbm_to_vmem [thread:$0]  %s2, 64, %s46, [#allocation6]
    $region13: #{tpu_custom_call.1} parent=1 // pred_fallthru
      _
    // Predicated region
    $region14: #{tpu_custom_call.1} parent=1 // pred_check
      _
    $region15: #{tpu_custom_call.1} parent=1 // pred_check_branch
      %50 = sbr.rel (0) target = $region17
    $region16: #{tpu_custom_call.1} parent=1 // pred_region
      %s52 = ssub.s32 8192, 8192
      %53 = vsyncadd [#allocation9], %s52
      %s54 = sshll.u32 [#allocation8], 4
      %s55 = int_to_ptr.vmem [resolvable:$true] %s54
      %60 = dma.hbm_to_vmem [thread:$0]  %s3, 8192, %s55, [#allocation9], 128, 128, 8
    $region17: #{tpu_custom_call.1} parent=1 // pred_fallthru
      _
    // Predicated region
    $region18: #{tpu_custom_call.1} parent=1 // pred_check
      _
    $region19: #{tpu_custom_call.1} parent=1 // pred_check_branch
      %62 = sbr.rel (0) target = $region21
    $region20: #{tpu_custom_call.1} parent=1 // pred_region
      %s64 = ssub.s32 16, 16
      %65 = vsyncadd [#allocation9], %s64
      %s67 = sshll.u32 [#allocation10], 4
      %s68 = int_to_ptr.vmem [resolvable:$true] %s67
      %70 = dma.hbm_to_vmem [thread:$0]  %s4, 16, %s68, [#allocation9]
    $region21: #{tpu_custom_call.1} parent=1 // pred_fallthru
      _
    // Predicated region
    $region22: #{tpu_custom_call.1} parent=1 // pred_check
      _
    $region23: #{tpu_custom_call.1} parent=1 // pred_check_branch
      %72 = sbr.rel (0) target = $region25
    $region24: #{tpu_custom_call.1} parent=1 // pred_region
      %s74 = ssub.s32 4096, 4096
      %75 = vsyncadd [#allocation12], %s74
      %s76 = sshll.u32 [#allocation11], 4
      %s77 = int_to_ptr.vmem [resolvable:$true] %s76
      %82 = dma.hbm_to_vmem [thread:$0]  %s5, 4096, %s77, [#allocation12], 256, 256, 16
    $region25: #{tpu_custom_call.1} parent=1 // pred_fallthru
      _
    // Predicated region
    $region26: #{tpu_custom_call.1} parent=1 // pred_check
      _
    $region27: #{tpu_custom_call.1} parent=1 // pred_check_branch
      %84 = sbr.rel (0) target = $region29
    $region28: #{tpu_custom_call.1} parent=1 // pred_region
      %s86 = ssub.s32 32, 32
      %87 = vsyncadd [#allocation12], %s86
      %s89 = sshll.u32 [#allocation13], 4
      %s90 = int_to_ptr.vmem [resolvable:$true] %s89
      %92 = dma.hbm_to_vmem [thread:$0]  %s6, 32, %s90, [#allocation12]
    $region29: #{tpu_custom_call.1} parent=1 // pred_fallthru
      _
    // Predicated region
    $region30: #{tpu_custom_call.1} parent=1 // pred_check
      _
    $region31: #{tpu_custom_call.1} parent=1 // pred_check_branch
      %94 = sbr.rel (0) target = $region33
    $region32: #{tpu_custom_call.1} parent=1 // pred_region
      %95 = dma.done [#allocation3], 256
    $region33: #{tpu_custom_call.1} parent=1 // pred_fallthru
      _
    // Predicated region
    $region34: #{tpu_custom_call.1} parent=1 // pred_check
      _
    $region35: #{tpu_custom_call.1} parent=1 // pred_check_branch
      %97 = sbr.rel (0) target = $region37
    $region36: #{tpu_custom_call.1} parent=1 // pred_region
      %98 = dma.done [#allocation6], 65536
    $region37: #{tpu_custom_call.1} parent=1 // pred_fallthru
      _
    // Predicated region
    $region38: #{tpu_custom_call.1} parent=1 // pred_check
      _
    $region39: #{tpu_custom_call.1} parent=1 // pred_check_branch
      %100 = sbr.rel (0) target = $region41
    $region40: #{tpu_custom_call.1} parent=1 // pred_region
      %101 = dma.done [#allocation6], 64
    $region41: #{tpu_custom_call.1} parent=1 // pred_fallthru
      _
    // Predicated region
    $region42: #{tpu_custom_call.1} parent=1 // pred_check
      _
    $region43: #{tpu_custom_call.1} parent=1 // pred_check_branch
      %103 = sbr.rel (0) target = $region45
    $region44: #{tpu_custom_call.1} parent=1 // pred_region
      %104 = dma.done [#allocation9], 8192
    $region45: #{tpu_custom_call.1} parent=1 // pred_fallthru
      _
    // Predicated region
    $region46: #{tpu_custom_call.1} parent=1 // pred_check
      _
    $region47: #{tpu_custom_call.1} parent=1 // pred_check_branch
      %106 = sbr.rel (0) target = $region49
    $region48: #{tpu_custom_call.1} parent=1 // pred_region
      %107 = dma.done [#allocation9], 16
    $region49: #{tpu_custom_call.1} parent=1 // pred_fallthru
      _
    // Predicated region
    $region50: #{tpu_custom_call.1} parent=1 // pred_check
      _
    $region51: #{tpu_custom_call.1} parent=1 // pred_check_branch
      %109 = sbr.rel (0) target = $region53
    $region52: #{tpu_custom_call.1} parent=1 // pred_region
      %110 = dma.done [#allocation12], 4096
    $region53: #{tpu_custom_call.1} parent=1 // pred_fallthru
      _
    // Predicated region
    $region54: #{tpu_custom_call.1} parent=1 // pred_check
      _
    $region55: #{tpu_custom_call.1} parent=1 // pred_check_branch
      %112 = sbr.rel (0) target = $region57
    $region56: #{tpu_custom_call.1} parent=1 // pred_region
      %113 = dma.done [#allocation12], 32
    $region57: #{tpu_custom_call.1} parent=1 // pred_fallthru
      _
    %v114 = vld [vmem:[#allocation2] sm:$0xff]
    %v115 = vld [vmem:[#allocation2 + $0x8] sm:$0xff]
    %v116 = vld [vmem:[#allocation5] sm:$0xff]
    %v117 = vld [vmem:[#allocation5 + $0x8] sm:$0xff]
    %v118 = vld [vmem:[#allocation5 + $0x10] sm:$0xff]
    %v119 = vld [vmem:[#allocation5 + $0x18] sm:$0xff]
    %v120 = vld [vmem:[#allocation5 + $0x20] sm:$0xff]
    %v121 = vld [vmem:[#allocation5 + $0x28] sm:$0xff]
    %v122 = vld [vmem:[#allocation5 + $0x30] sm:$0xff]
    %v123 = vld [vmem:[#allocation5 + $0x38] sm:$0xff]
    %v124 = vld [vmem:[#allocation5 + $0x40] sm:$0xff]
    %v125 = vld [vmem:[#allocation5 + $0x48] sm:$0xff]
    %v126 = vld [vmem:[#allocation5 + $0x50] sm:$0xff]
    %v127 = vld [vmem:[#allocation5 + $0x58] sm:$0xff]
    %v128 = vld [vmem:[#allocation5 + $0x60] sm:$0xff]
    %v129 = vld [vmem:[#allocation5 + $0x68] sm:$0xff]
    %v130 = vld [vmem:[#allocation5 + $0x70] sm:$0xff]
    %v131 = vld [vmem:[#allocation5 + $0x78] sm:$0xff]
    %v132 = vld [vmem:[#allocation5 + $0x80] sm:$0xff]
    %v133 = vld [vmem:[#allocation5 + $0x88] sm:$0xff]
    %v134 = vld [vmem:[#allocation5 + $0x90] sm:$0xff]
    %v135 = vld [vmem:[#allocation5 + $0x98] sm:$0xff]
    %v136 = vld [vmem:[#allocation5 + $0xa0] sm:$0xff]
    %v137 = vld [vmem:[#allocation5 + $0xa8] sm:$0xff]
    %v138 = vld [vmem:[#allocation5 + $0xb0] sm:$0xff]
    %v139 = vld [vmem:[#allocation5 + $0xb8] sm:$0xff]
    %v140 = vld [vmem:[#allocation5 + $0xc0] sm:$0xff]
    %v141 = vld [vmem:[#allocation5 + $0xc8] sm:$0xff]
    %v142 = vld [vmem:[#allocation5 + $0xd0] sm:$0xff]
    %v143 = vld [vmem:[#allocation5 + $0xd8] sm:$0xff]
    %v144 = vld [vmem:[#allocation5 + $0xe0] sm:$0xff]
    %v145 = vld [vmem:[#allocation5 + $0xe8] sm:$0xff]
    %v146 = vld [vmem:[#allocation5 + $0xf0] sm:$0xff]
    %v147 = vld [vmem:[#allocation5 + $0xf8] sm:$0xff]
    %v148 = vld [vmem:[#allocation5 + $0x100] sm:$0xff]
    %v149 = vld [vmem:[#allocation5 + $0x108] sm:$0xff]
    %v150 = vld [vmem:[#allocation5 + $0x110] sm:$0xff]
    %v151 = vld [vmem:[#allocation5 + $0x118] sm:$0xff]
    %v152 = vld [vmem:[#allocation5 + $0x120] sm:$0xff]
    %v153 = vld [vmem:[#allocation5 + $0x128] sm:$0xff]
    %v154 = vld [vmem:[#allocation5 + $0x130] sm:$0xff]
    %v155 = vld [vmem:[#allocation5 + $0x138] sm:$0xff]
    %v156 = vld [vmem:[#allocation5 + $0x140] sm:$0xff]
    %v157 = vld [vmem:[#allocation5 + $0x148] sm:$0xff]
    %v158 = vld [vmem:[#allocation5 + $0x150] sm:$0xff]
    %v159 = vld [vmem:[#allocation5 + $0x158] sm:$0xff]
    %v160 = vld [vmem:[#allocation5 + $0x160] sm:$0xff]
    %v161 = vld [vmem:[#allocation5 + $0x168] sm:$0xff]
    %v162 = vld [vmem:[#allocation5 + $0x170] sm:$0xff]
    %v163 = vld [vmem:[#allocation5 + $0x178] sm:$0xff]
    %v164 = vld [vmem:[#allocation5 + $0x180] sm:$0xff]
    %v165 = vld [vmem:[#allocation5 + $0x188] sm:$0xff]
    %v166 = vld [vmem:[#allocation5 + $0x190] sm:$0xff]
    %v167 = vld [vmem:[#allocation5 + $0x198] sm:$0xff]
    %v168 = vld [vmem:[#allocation5 + $0x1a0] sm:$0xff]
    %v169 = vld [vmem:[#allocation5 + $0x1a8] sm:$0xff]
    %v170 = vld [vmem:[#allocation5 + $0x1b0] sm:$0xff]
    %v171 = vld [vmem:[#allocation5 + $0x1b8] sm:$0xff]
    %v172 = vld [vmem:[#allocation5 + $0x1c0] sm:$0xff]
    %v173 = vld [vmem:[#allocation5 + $0x1c8] sm:$0xff]
    %v174 = vld [vmem:[#allocation5 + $0x1d0] sm:$0xff]
    %v175 = vld [vmem:[#allocation5 + $0x1d8] sm:$0xff]
    %v176 = vld [vmem:[#allocation5 + $0x1e0] sm:$0xff]
    %v177 = vld [vmem:[#allocation5 + $0x1e8] sm:$0xff]
    %v178 = vld [vmem:[#allocation5 + $0x1f0] sm:$0xff]
    %v179 = vld [vmem:[#allocation5 + $0x1f8] sm:$0xff]
    %v180 = vld [vmem:[#allocation5 + $0x200] sm:$0xff]
    %v181 = vld [vmem:[#allocation5 + $0x208] sm:$0xff]
    %v182 = vld [vmem:[#allocation5 + $0x210] sm:$0xff]
    %v183 = vld [vmem:[#allocation5 + $0x218] sm:$0xff]
    %v184 = vld [vmem:[#allocation5 + $0x220] sm:$0xff]
    %v185 = vld [vmem:[#allocation5 + $0x228] sm:$0xff]
    %v186 = vld [vmem:[#allocation5 + $0x230] sm:$0xff]
    %v187 = vld [vmem:[#allocation5 + $0x238] sm:$0xff]
    %v188 = vld [vmem:[#allocation5 + $0x240] sm:$0xff]
    %v189 = vld [vmem:[#allocation5 + $0x248] sm:$0xff]
    %v190 = vld [vmem:[#allocation5 + $0x250] sm:$0xff]
    %v191 = vld [vmem:[#allocation5 + $0x258] sm:$0xff]
    %v192 = vld [vmem:[#allocation5 + $0x260] sm:$0xff]
    %v193 = vld [vmem:[#allocation5 + $0x268] sm:$0xff]
    %v194 = vld [vmem:[#allocation5 + $0x270] sm:$0xff]
    %v195 = vld [vmem:[#allocation5 + $0x278] sm:$0xff]
    %v196 = vld [vmem:[#allocation5 + $0x280] sm:$0xff]
    %v197 = vld [vmem:[#allocation5 + $0x288] sm:$0xff]
    %v198 = vld [vmem:[#allocation5 + $0x290] sm:$0xff]
    %v199 = vld [vmem:[#allocation5 + $0x298] sm:$0xff]
    %v200 = vld [vmem:[#allocation5 + $0x2a0] sm:$0xff]
    %v201 = vld [vmem:[#allocation5 + $0x2a8] sm:$0xff]
    %v202 = vld [vmem:[#allocation5 + $0x2b0] sm:$0xff]
    %v203 = vld [vmem:[#allocation5 + $0x2b8] sm:$0xff]
    %v204 = vld [vmem:[#allocation5 + $0x2c0] sm:$0xff]
    %v205 = vld [vmem:[#allocation5 + $0x2c8] sm:$0xff]
    %v206 = vld [vmem:[#allocation5 + $0x2d0] sm:$0xff]
    %v207 = vld [vmem:[#allocation5 + $0x2d8] sm:$0xff]
    %v208 = vld [vmem:[#allocation5 + $0x2e0] sm:$0xff]
    %v209 = vld [vmem:[#allocation5 + $0x2e8] sm:$0xff]
    %v210 = vld [vmem:[#allocation5 + $0x2f0] sm:$0xff]
    %v211 = vld [vmem:[#allocation5 + $0x2f8] sm:$0xff]
    %v212 = vld [vmem:[#allocation5 + $0x300] sm:$0xff]
    %v213 = vld [vmem:[#allocation5 + $0x308] sm:$0xff]
    %v214 = vld [vmem:[#allocation5 + $0x310] sm:$0xff]
    %v215 = vld [vmem:[#allocation5 + $0x318] sm:$0xff]
    %v216 = vld [vmem:[#allocation5 + $0x320] sm:$0xff]
    %v217 = vld [vmem:[#allocation5 + $0x328] sm:$0xff]
    %v218 = vld [vmem:[#allocation5 + $0x330] sm:$0xff]
    %v219 = vld [vmem:[#allocation5 + $0x338] sm:$0xff]
    %v220 = vld [vmem:[#allocation5 + $0x340] sm:$0xff]
    %v221 = vld [vmem:[#allocation5 + $0x348] sm:$0xff]
    %v222 = vld [vmem:[#allocation5 + $0x350] sm:$0xff]
    %v223 = vld [vmem:[#allocation5 + $0x358] sm:$0xff]
    %v224 = vld [vmem:[#allocation5 + $0x360] sm:$0xff]
    %v225 = vld [vmem:[#allocation5 + $0x368] sm:$0xff]
    %v226 = vld [vmem:[#allocation5 + $0x370] sm:$0xff]
    %v227 = vld [vmem:[#allocation5 + $0x378] sm:$0xff]
    %v228 = vld [vmem:[#allocation5 + $0x380] sm:$0xff]
    %v229 = vld [vmem:[#allocation5 + $0x388] sm:$0xff]
    %v230 = vld [vmem:[#allocation5 + $0x390] sm:$0xff]
    %v231 = vld [vmem:[#allocation5 + $0x398] sm:$0xff]
    %v232 = vld [vmem:[#allocation5 + $0x3a0] sm:$0xff]
    %v233 = vld [vmem:[#allocation5 + $0x3a8] sm:$0xff]
    %v234 = vld [vmem:[#allocation5 + $0x3b0] sm:$0xff]
    %v235 = vld [vmem:[#allocation5 + $0x3b8] sm:$0xff]
    %v236 = vld [vmem:[#allocation5 + $0x3c0] sm:$0xff]
    %v237 = vld [vmem:[#allocation5 + $0x3c8] sm:$0xff]
    %v238 = vld [vmem:[#allocation5 + $0x3d0] sm:$0xff]
    %v239 = vld [vmem:[#allocation5 + $0x3d8] sm:$0xff]
    %v240 = vld [vmem:[#allocation5 + $0x3e0] sm:$0xff]
    %v241 = vld [vmem:[#allocation5 + $0x3e8] sm:$0xff]
    %v242 = vld [vmem:[#allocation5 + $0x3f0] sm:$0xff]
    %v243 = vld [vmem:[#allocation5 + $0x3f8] sm:$0xff]
    %v244 = vld [vmem:[#allocation5 + $0x400] sm:$0xff]
    %v245 = vld [vmem:[#allocation5 + $0x408] sm:$0xff]
    %v246 = vld [vmem:[#allocation5 + $0x410] sm:$0xff]
    %v247 = vld [vmem:[#allocation5 + $0x418] sm:$0xff]
    %v248 = vld [vmem:[#allocation5 + $0x420] sm:$0xff]
    %v249 = vld [vmem:[#allocation5 + $0x428] sm:$0xff]
    %v250 = vld [vmem:[#allocation5 + $0x430] sm:$0xff]
    %v251 = vld [vmem:[#allocation5 + $0x438] sm:$0xff]
    %v252 = vld [vmem:[#allocation5 + $0x440] sm:$0xff]
    %v253 = vld [vmem:[#allocation5 + $0x448] sm:$0xff]
    %v254 = vld [vmem:[#allocation5 + $0x450] sm:$0xff]
    %v255 = vld [vmem:[#allocation5 + $0x458] sm:$0xff]
    %v256 = vld [vmem:[#allocation5 + $0x460] sm:$0xff]
    %v257 = vld [vmem:[#allocation5 + $0x468] sm:$0xff]
    %v258 = vld [vmem:[#allocation5 + $0x470] sm:$0xff]
    %v259 = vld [vmem:[#allocation5 + $0x478] sm:$0xff]
    %v260 = vld [vmem:[#allocation5 + $0x480] sm:$0xff]
    %v261 = vld [vmem:[#allocation5 + $0x488] sm:$0xff]
    %v262 = vld [vmem:[#allocation5 + $0x490] sm:$0xff]
    %v263 = vld [vmem:[#allocation5 + $0x498] sm:$0xff]
    %v264 = vld [vmem:[#allocation5 + $0x4a0] sm:$0xff]
    %v265 = vld [vmem:[#allocation5 + $0x4a8] sm:$0xff]
    %v266 = vld [vmem:[#allocation5 + $0x4b0] sm:$0xff]
    %v267 = vld [vmem:[#allocation5 + $0x4b8] sm:$0xff]
    %v268 = vld [vmem:[#allocation5 + $0x4c0] sm:$0xff]
    %v269 = vld [vmem:[#allocation5 + $0x4c8] sm:$0xff]
    %v270 = vld [vmem:[#allocation5 + $0x4d0] sm:$0xff]
    %v271 = vld [vmem:[#allocation5 + $0x4d8] sm:$0xff]
    %v272 = vld [vmem:[#allocation5 + $0x4e0] sm:$0xff]
    %v273 = vld [vmem:[#allocation5 + $0x4e8] sm:$0xff]
    %v274 = vld [vmem:[#allocation5 + $0x4f0] sm:$0xff]
    %v275 = vld [vmem:[#allocation5 + $0x4f8] sm:$0xff]
    %v276 = vld [vmem:[#allocation5 + $0x500] sm:$0xff]
    %v277 = vld [vmem:[#allocation5 + $0x508] sm:$0xff]
    %v278 = vld [vmem:[#allocation5 + $0x510] sm:$0xff]
    %v279 = vld [vmem:[#allocation5 + $0x518] sm:$0xff]
    %v280 = vld [vmem:[#allocation5 + $0x520] sm:$0xff]
    %v281 = vld [vmem:[#allocation5 + $0x528] sm:$0xff]
    %v282 = vld [vmem:[#allocation5 + $0x530] sm:$0xff]
    %v283 = vld [vmem:[#allocation5 + $0x538] sm:$0xff]
    %v284 = vld [vmem:[#allocation5 + $0x540] sm:$0xff]
    %v285 = vld [vmem:[#allocation5 + $0x548] sm:$0xff]
    %v286 = vld [vmem:[#allocation5 + $0x550] sm:$0xff]
    %v287 = vld [vmem:[#allocation5 + $0x558] sm:$0xff]
    %v288 = vld [vmem:[#allocation5 + $0x560] sm:$0xff]
    %v289 = vld [vmem:[#allocation5 + $0x568] sm:$0xff]
    %v290 = vld [vmem:[#allocation5 + $0x570] sm:$0xff]
    %v291 = vld [vmem:[#allocation5 + $0x578] sm:$0xff]
    %v292 = vld [vmem:[#allocation5 + $0x580] sm:$0xff]
    %v293 = vld [vmem:[#allocation5 + $0x588] sm:$0xff]
    %v294 = vld [vmem:[#allocation5 + $0x590] sm:$0xff]
    %v295 = vld [vmem:[#allocation5 + $0x598] sm:$0xff]
    %v296 = vld [vmem:[#allocation5 + $0x5a0] sm:$0xff]
    %v297 = vld [vmem:[#allocation5 + $0x5a8] sm:$0xff]
    %v298 = vld [vmem:[#allocation5 + $0x5b0] sm:$0xff]
    %v299 = vld [vmem:[#allocation5 + $0x5b8] sm:$0xff]
    %v300 = vld [vmem:[#allocation5 + $0x5c0] sm:$0xff]
    %v301 = vld [vmem:[#allocation5 + $0x5c8] sm:$0xff]
    %v302 = vld [vmem:[#allocation5 + $0x5d0] sm:$0xff]
    %v303 = vld [vmem:[#allocation5 + $0x5d8] sm:$0xff]
    %v304 = vld [vmem:[#allocation5 + $0x5e0] sm:$0xff]
    %v305 = vld [vmem:[#allocation5 + $0x5e8] sm:$0xff]
    %v306 = vld [vmem:[#allocation5 + $0x5f0] sm:$0xff]
    %v307 = vld [vmem:[#allocation5 + $0x5f8] sm:$0xff]
    %v308 = vld [vmem:[#allocation5 + $0x600] sm:$0xff]
    %v309 = vld [vmem:[#allocation5 + $0x608] sm:$0xff]
    %v310 = vld [vmem:[#allocation5 + $0x610] sm:$0xff]
    %v311 = vld [vmem:[#allocation5 + $0x618] sm:$0xff]
    %v312 = vld [vmem:[#allocation5 + $0x620] sm:$0xff]
    %v313 = vld [vmem:[#allocation5 + $0x628] sm:$0xff]
    %v314 = vld [vmem:[#allocation5 + $0x630] sm:$0xff]
    %v315 = vld [vmem:[#allocation5 + $0x638] sm:$0xff]
    %v316 = vld [vmem:[#allocation5 + $0x640] sm:$0xff]
    %v317 = vld [vmem:[#allocation5 + $0x648] sm:$0xff]
    %v318 = vld [vmem:[#allocation5 + $0x650] sm:$0xff]
    %v319 = vld [vmem:[#allocation5 + $0x658] sm:$0xff]
    %v320 = vld [vmem:[#allocation5 + $0x660] sm:$0xff]
    %v321 = vld [vmem:[#allocation5 + $0x668] sm:$0xff]
    %v322 = vld [vmem:[#allocation5 + $0x670] sm:$0xff]
    %v323 = vld [vmem:[#allocation5 + $0x678] sm:$0xff]
    %v324 = vld [vmem:[#allocation5 + $0x680] sm:$0xff]
    %v325 = vld [vmem:[#allocation5 + $0x688] sm:$0xff]
    %v326 = vld [vmem:[#allocation5 + $0x690] sm:$0xff]
    %v327 = vld [vmem:[#allocation5 + $0x698] sm:$0xff]
    %v328 = vld [vmem:[#allocation5 + $0x6a0] sm:$0xff]
    %v329 = vld [vmem:[#allocation5 + $0x6a8] sm:$0xff]
    %v330 = vld [vmem:[#allocation5 + $0x6b0] sm:$0xff]
    %v331 = vld [vmem:[#allocation5 + $0x6b8] sm:$0xff]
    %v332 = vld [vmem:[#allocation5 + $0x6c0] sm:$0xff]
    %v333 = vld [vmem:[#allocation5 + $0x6c8] sm:$0xff]
    %v334 = vld [vmem:[#allocation5 + $0x6d0] sm:$0xff]
    %v335 = vld [vmem:[#allocation5 + $0x6d8] sm:$0xff]
    %v336 = vld [vmem:[#allocation5 + $0x6e0] sm:$0xff]
    %v337 = vld [vmem:[#allocation5 + $0x6e8] sm:$0xff]
    %v338 = vld [vmem:[#allocation5 + $0x6f0] sm:$0xff]
    %v339 = vld [vmem:[#allocation5 + $0x6f8] sm:$0xff]
    %v340 = vld [vmem:[#allocation5 + $0x700] sm:$0xff]
    %v341 = vld [vmem:[#allocation5 + $0x708] sm:$0xff]
    %v342 = vld [vmem:[#allocation5 + $0x710] sm:$0xff]
    %v343 = vld [vmem:[#allocation5 + $0x718] sm:$0xff]
    %v344 = vld [vmem:[#allocation5 + $0x720] sm:$0xff]
    %v345 = vld [vmem:[#allocation5 + $0x728] sm:$0xff]
    %v346 = vld [vmem:[#allocation5 + $0x730] sm:$0xff]
    %v347 = vld [vmem:[#allocation5 + $0x738] sm:$0xff]
    %v348 = vld [vmem:[#allocation5 + $0x740] sm:$0xff]
    %v349 = vld [vmem:[#allocation5 + $0x748] sm:$0xff]
    %v350 = vld [vmem:[#allocation5 + $0x750] sm:$0xff]
    %v351 = vld [vmem:[#allocation5 + $0x758] sm:$0xff]
    %v352 = vld [vmem:[#allocation5 + $0x760] sm:$0xff]
    %v353 = vld [vmem:[#allocation5 + $0x768] sm:$0xff]
    %v354 = vld [vmem:[#allocation5 + $0x770] sm:$0xff]
    %v355 = vld [vmem:[#allocation5 + $0x778] sm:$0xff]
    %v356 = vld [vmem:[#allocation5 + $0x780] sm:$0xff]
    %v357 = vld [vmem:[#allocation5 + $0x788] sm:$0xff]
    %v358 = vld [vmem:[#allocation5 + $0x790] sm:$0xff]
    %v359 = vld [vmem:[#allocation5 + $0x798] sm:$0xff]
    %v360 = vld [vmem:[#allocation5 + $0x7a0] sm:$0xff]
    %v361 = vld [vmem:[#allocation5 + $0x7a8] sm:$0xff]
    %v362 = vld [vmem:[#allocation5 + $0x7b0] sm:$0xff]
    %v363 = vld [vmem:[#allocation5 + $0x7b8] sm:$0xff]
    %v364 = vld [vmem:[#allocation5 + $0x7c0] sm:$0xff]
    %v365 = vld [vmem:[#allocation5 + $0x7c8] sm:$0xff]
    %v366 = vld [vmem:[#allocation5 + $0x7d0] sm:$0xff]
    %v367 = vld [vmem:[#allocation5 + $0x7d8] sm:$0xff]
    %v368 = vld [vmem:[#allocation5 + $0x7e0] sm:$0xff]
    %v369 = vld [vmem:[#allocation5 + $0x7e8] sm:$0xff]
    %v370 = vld [vmem:[#allocation5 + $0x7f0] sm:$0xff]
    %v371 = vld [vmem:[#allocation5 + $0x7f8] sm:$0xff]
    %v372 = vld [vmem:[#allocation5 + $0x800] sm:$0xff]
    %v373 = vld [vmem:[#allocation5 + $0x808] sm:$0xff]
    %v374 = vld [vmem:[#allocation5 + $0x810] sm:$0xff]
    %v375 = vld [vmem:[#allocation5 + $0x818] sm:$0xff]
    %v376 = vld [vmem:[#allocation5 + $0x820] sm:$0xff]
    %v377 = vld [vmem:[#allocation5 + $0x828] sm:$0xff]
    %v378 = vld [vmem:[#allocation5 + $0x830] sm:$0xff]
    %v379 = vld [vmem:[#allocation5 + $0x838] sm:$0xff]
    %v380 = vld [vmem:[#allocation5 + $0x840] sm:$0xff]
    %v381 = vld [vmem:[#allocation5 + $0x848] sm:$0xff]
    %v382 = vld [vmem:[#allocation5 + $0x850] sm:$0xff]
    %v383 = vld [vmem:[#allocation5 + $0x858] sm:$0xff]
    %v384 = vld [vmem:[#allocation5 + $0x860] sm:$0xff]
    %v385 = vld [vmem:[#allocation5 + $0x868] sm:$0xff]
    %v386 = vld [vmem:[#allocation5 + $0x870] sm:$0xff]
    %v387 = vld [vmem:[#allocation5 + $0x878] sm:$0xff]
    %v388 = vld [vmem:[#allocation5 + $0x880] sm:$0xff]
    %v389 = vld [vmem:[#allocation5 + $0x888] sm:$0xff]
    %v390 = vld [vmem:[#allocation5 + $0x890] sm:$0xff]
    %v391 = vld [vmem:[#allocation5 + $0x898] sm:$0xff]
    %v392 = vld [vmem:[#allocation5 + $0x8a0] sm:$0xff]
    %v393 = vld [vmem:[#allocation5 + $0x8a8] sm:$0xff]
    %v394 = vld [vmem:[#allocation5 + $0x8b0] sm:$0xff]
    %v395 = vld [vmem:[#allocation5 + $0x8b8] sm:$0xff]
    %v396 = vld [vmem:[#allocation5 + $0x8c0] sm:$0xff]
    %v397 = vld [vmem:[#allocation5 + $0x8c8] sm:$0xff]
    %v398 = vld [vmem:[#allocation5 + $0x8d0] sm:$0xff]
    %v399 = vld [vmem:[#allocation5 + $0x8d8] sm:$0xff]
    %v400 = vld [vmem:[#allocation5 + $0x8e0] sm:$0xff]
    %v401 = vld [vmem:[#allocation5 + $0x8e8] sm:$0xff]
    %v402 = vld [vmem:[#allocation5 + $0x8f0] sm:$0xff]
    %v403 = vld [vmem:[#allocation5 + $0x8f8] sm:$0xff]
    %v404 = vld [vmem:[#allocation5 + $0x900] sm:$0xff]
    %v405 = vld [vmem:[#allocation5 + $0x908] sm:$0xff]
    %v406 = vld [vmem:[#allocation5 + $0x910] sm:$0xff]
    %v407 = vld [vmem:[#allocation5 + $0x918] sm:$0xff]
    %v408 = vld [vmem:[#allocation5 + $0x920] sm:$0xff]
    %v409 = vld [vmem:[#allocation5 + $0x928] sm:$0xff]
    %v410 = vld [vmem:[#allocation5 + $0x930] sm:$0xff]
    %v411 = vld [vmem:[#allocation5 + $0x938] sm:$0xff]
    %v412 = vld [vmem:[#allocation5 + $0x940] sm:$0xff]
    %v413 = vld [vmem:[#allocation5 + $0x948] sm:$0xff]
    %v414 = vld [vmem:[#allocation5 + $0x950] sm:$0xff]
    %v415 = vld [vmem:[#allocation5 + $0x958] sm:$0xff]
    %v416 = vld [vmem:[#allocation5 + $0x960] sm:$0xff]
    %v417 = vld [vmem:[#allocation5 + $0x968] sm:$0xff]
    %v418 = vld [vmem:[#allocation5 + $0x970] sm:$0xff]
    %v419 = vld [vmem:[#allocation5 + $0x978] sm:$0xff]
    %v420 = vld [vmem:[#allocation5 + $0x980] sm:$0xff]
    %v421 = vld [vmem:[#allocation5 + $0x988] sm:$0xff]
    %v422 = vld [vmem:[#allocation5 + $0x990] sm:$0xff]
    %v423 = vld [vmem:[#allocation5 + $0x998] sm:$0xff]
    %v424 = vld [vmem:[#allocation5 + $0x9a0] sm:$0xff]
    %v425 = vld [vmem:[#allocation5 + $0x9a8] sm:$0xff]
    %v426 = vld [vmem:[#allocation5 + $0x9b0] sm:$0xff]
    %v427 = vld [vmem:[#allocation5 + $0x9b8] sm:$0xff]
    %v428 = vld [vmem:[#allocation5 + $0x9c0] sm:$0xff]
    %v429 = vld [vmem:[#allocation5 + $0x9c8] sm:$0xff]
    %v430 = vld [vmem:[#allocation5 + $0x9d0] sm:$0xff]
    %v431 = vld [vmem:[#allocation5 + $0x9d8] sm:$0xff]
    %v432 = vld [vmem:[#allocation5 + $0x9e0] sm:$0xff]
    %v433 = vld [vmem:[#allocation5 + $0x9e8] sm:$0xff]
    %v434 = vld [vmem:[#allocation5 + $0x9f0] sm:$0xff]
    %v435 = vld [vmem:[#allocation5 + $0x9f8] sm:$0xff]
    %v436 = vld [vmem:[#allocation5 + $0xa00] sm:$0xff]
    %v437 = vld [vmem:[#allocation5 + $0xa08] sm:$0xff]
    %v438 = vld [vmem:[#allocation5 + $0xa10] sm:$0xff]
    %v439 = vld [vmem:[#allocation5 + $0xa18] sm:$0xff]
    %v440 = vld [vmem:[#allocation5 + $0xa20] sm:$0xff]
    %v441 = vld [vmem:[#allocation5 + $0xa28] sm:$0xff]
    %v442 = vld [vmem:[#allocation5 + $0xa30] sm:$0xff]
    %v443 = vld [vmem:[#allocation5 + $0xa38] sm:$0xff]
    %v444 = vld [vmem:[#allocation5 + $0xa40] sm:$0xff]
    %v445 = vld [vmem:[#allocation5 + $0xa48] sm:$0xff]
    %v446 = vld [vmem:[#allocation5 + $0xa50] sm:$0xff]
    %v447 = vld [vmem:[#allocation5 + $0xa58] sm:$0xff]
    %v448 = vld [vmem:[#allocation5 + $0xa60] sm:$0xff]
    %v449 = vld [vmem:[#allocation5 + $0xa68] sm:$0xff]
    %v450 = vld [vmem:[#allocation5 + $0xa70] sm:$0xff]
    %v451 = vld [vmem:[#allocation5 + $0xa78] sm:$0xff]
    %v452 = vld [vmem:[#allocation5 + $0xa80] sm:$0xff]
    %v453 = vld [vmem:[#allocation5 + $0xa88] sm:$0xff]
    %v454 = vld [vmem:[#allocation5 + $0xa90] sm:$0xff]
    %v455 = vld [vmem:[#allocation5 + $0xa98] sm:$0xff]
    %v456 = vld [vmem:[#allocation5 + $0xaa0] sm:$0xff]
    %v457 = vld [vmem:[#allocation5 + $0xaa8] sm:$0xff]
    %v458 = vld [vmem:[#allocation5 + $0xab0] sm:$0xff]
    %v459 = vld [vmem:[#allocation5 + $0xab8] sm:$0xff]
    %v460 = vld [vmem:[#allocation5 + $0xac0] sm:$0xff]
    %v461 = vld [vmem:[#allocation5 + $0xac8] sm:$0xff]
    %v462 = vld [vmem:[#allocation5 + $0xad0] sm:$0xff]
    %v463 = vld [vmem:[#allocation5 + $0xad8] sm:$0xff]
    %v464 = vld [vmem:[#allocation5 + $0xae0] sm:$0xff]
    %v465 = vld [vmem:[#allocation5 + $0xae8] sm:$0xff]
    %v466 = vld [vmem:[#allocation5 + $0xaf0] sm:$0xff]
    %v467 = vld [vmem:[#allocation5 + $0xaf8] sm:$0xff]
    %v468 = vld [vmem:[#allocation5 + $0xb00] sm:$0xff]
    %v469 = vld [vmem:[#allocation5 + $0xb08] sm:$0xff]
    %v470 = vld [vmem:[#allocation5 + $0xb10] sm:$0xff]
    %v471 = vld [vmem:[#allocation5 + $0xb18] sm:$0xff]
    %v472 = vld [vmem:[#allocation5 + $0xb20] sm:$0xff]
    %v473 = vld [vmem:[#allocation5 + $0xb28] sm:$0xff]
    %v474 = vld [vmem:[#allocation5 + $0xb30] sm:$0xff]
    %v475 = vld [vmem:[#allocation5 + $0xb38] sm:$0xff]
    %v476 = vld [vmem:[#allocation5 + $0xb40] sm:$0xff]
    %v477 = vld [vmem:[#allocation5 + $0xb48] sm:$0xff]
    %v478 = vld [vmem:[#allocation5 + $0xb50] sm:$0xff]
    %v479 = vld [vmem:[#allocation5 + $0xb58] sm:$0xff]
    %v480 = vld [vmem:[#allocation5 + $0xb60] sm:$0xff]
    %v481 = vld [vmem:[#allocation5 + $0xb68] sm:$0xff]
    %v482 = vld [vmem:[#allocation5 + $0xb70] sm:$0xff]
    %v483 = vld [vmem:[#allocation5 + $0xb78] sm:$0xff]
    %v484 = vld [vmem:[#allocation5 + $0xb80] sm:$0xff]
    %v485 = vld [vmem:[#allocation5 + $0xb88] sm:$0xff]
    %v486 = vld [vmem:[#allocation5 + $0xb90] sm:$0xff]
    %v487 = vld [vmem:[#allocation5 + $0xb98] sm:$0xff]
    %v488 = vld [vmem:[#allocation5 + $0xba0] sm:$0xff]
    %v489 = vld [vmem:[#allocation5 + $0xba8] sm:$0xff]
    %v490 = vld [vmem:[#allocation5 + $0xbb0] sm:$0xff]
    %v491 = vld [vmem:[#allocation5 + $0xbb8] sm:$0xff]
    %v492 = vld [vmem:[#allocation5 + $0xbc0] sm:$0xff]
    %v493 = vld [vmem:[#allocation5 + $0xbc8] sm:$0xff]
    %v494 = vld [vmem:[#allocation5 + $0xbd0] sm:$0xff]
    %v495 = vld [vmem:[#allocation5 + $0xbd8] sm:$0xff]
    %v496 = vld [vmem:[#allocation5 + $0xbe0] sm:$0xff]
    %v497 = vld [vmem:[#allocation5 + $0xbe8] sm:$0xff]
    %v498 = vld [vmem:[#allocation5 + $0xbf0] sm:$0xff]
    %v499 = vld [vmem:[#allocation5 + $0xbf8] sm:$0xff]
    %v500 = vld [vmem:[#allocation5 + $0xc00] sm:$0xff]
    %v501 = vld [vmem:[#allocation5 + $0xc08] sm:$0xff]
    %v502 = vld [vmem:[#allocation5 + $0xc10] sm:$0xff]
    %v503 = vld [vmem:[#allocation5 + $0xc18] sm:$0xff]
    %v504 = vld [vmem:[#allocation5 + $0xc20] sm:$0xff]
    %v505 = vld [vmem:[#allocation5 + $0xc28] sm:$0xff]
    %v506 = vld [vmem:[#allocation5 + $0xc30] sm:$0xff]
    %v507 = vld [vmem:[#allocation5 + $0xc38] sm:$0xff]
    %v508 = vld [vmem:[#allocation5 + $0xc40] sm:$0xff]
    %v509 = vld [vmem:[#allocation5 + $0xc48] sm:$0xff]
    %v510 = vld [vmem:[#allocation5 + $0xc50] sm:$0xff]
    %v511 = vld [vmem:[#allocation5 + $0xc58] sm:$0xff]
    %v512 = vld [vmem:[#allocation5 + $0xc60] sm:$0xff]
    %v513 = vld [vmem:[#allocation5 + $0xc68] sm:$0xff]
    %v514 = vld [vmem:[#allocation5 + $0xc70] sm:$0xff]
    %v515 = vld [vmem:[#allocation5 + $0xc78] sm:$0xff]
    %v516 = vld [vmem:[#allocation5 + $0xc80] sm:$0xff]
    %v517 = vld [vmem:[#allocation5 + $0xc88] sm:$0xff]
    %v518 = vld [vmem:[#allocation5 + $0xc90] sm:$0xff]
    %v519 = vld [vmem:[#allocation5 + $0xc98] sm:$0xff]
    %v520 = vld [vmem:[#allocation5 + $0xca0] sm:$0xff]
    %v521 = vld [vmem:[#allocation5 + $0xca8] sm:$0xff]
    %v522 = vld [vmem:[#allocation5 + $0xcb0] sm:$0xff]
    %v523 = vld [vmem:[#allocation5 + $0xcb8] sm:$0xff]
    %v524 = vld [vmem:[#allocation5 + $0xcc0] sm:$0xff]
    %v525 = vld [vmem:[#allocation5 + $0xcc8] sm:$0xff]
    %v526 = vld [vmem:[#allocation5 + $0xcd0] sm:$0xff]
    %v527 = vld [vmem:[#allocation5 + $0xcd8] sm:$0xff]
    %v528 = vld [vmem:[#allocation5 + $0xce0] sm:$0xff]
    %v529 = vld [vmem:[#allocation5 + $0xce8] sm:$0xff]
    %v530 = vld [vmem:[#allocation5 + $0xcf0] sm:$0xff]
    %v531 = vld [vmem:[#allocation5 + $0xcf8] sm:$0xff]
    %v532 = vld [vmem:[#allocation5 + $0xd00] sm:$0xff]
    %v533 = vld [vmem:[#allocation5 + $0xd08] sm:$0xff]
    %v534 = vld [vmem:[#allocation5 + $0xd10] sm:$0xff]
    %v535 = vld [vmem:[#allocation5 + $0xd18] sm:$0xff]
    %v536 = vld [vmem:[#allocation5 + $0xd20] sm:$0xff]
    %v537 = vld [vmem:[#allocation5 + $0xd28] sm:$0xff]
    %v538 = vld [vmem:[#allocation5 + $0xd30] sm:$0xff]
    %v539 = vld [vmem:[#allocation5 + $0xd38] sm:$0xff]
    %v540 = vld [vmem:[#allocation5 + $0xd40] sm:$0xff]
    %v541 = vld [vmem:[#allocation5 + $0xd48] sm:$0xff]
    %v542 = vld [vmem:[#allocation5 + $0xd50] sm:$0xff]
    %v543 = vld [vmem:[#allocation5 + $0xd58] sm:$0xff]
    %v544 = vld [vmem:[#allocation5 + $0xd60] sm:$0xff]
    %v545 = vld [vmem:[#allocation5 + $0xd68] sm:$0xff]
    %v546 = vld [vmem:[#allocation5 + $0xd70] sm:$0xff]
    %v547 = vld [vmem:[#allocation5 + $0xd78] sm:$0xff]
    %v548 = vld [vmem:[#allocation5 + $0xd80] sm:$0xff]
    %v549 = vld [vmem:[#allocation5 + $0xd88] sm:$0xff]
    %v550 = vld [vmem:[#allocation5 + $0xd90] sm:$0xff]
    %v551 = vld [vmem:[#allocation5 + $0xd98] sm:$0xff]
    %v552 = vld [vmem:[#allocation5 + $0xda0] sm:$0xff]
    %v553 = vld [vmem:[#allocation5 + $0xda8] sm:$0xff]
    %v554 = vld [vmem:[#allocation5 + $0xdb0] sm:$0xff]
    %v555 = vld [vmem:[#allocation5 + $0xdb8] sm:$0xff]
    %v556 = vld [vmem:[#allocation5 + $0xdc0] sm:$0xff]
    %v557 = vld [vmem:[#allocation5 + $0xdc8] sm:$0xff]
    %v558 = vld [vmem:[#allocation5 + $0xdd0] sm:$0xff]
    %v559 = vld [vmem:[#allocation5 + $0xdd8] sm:$0xff]
    %v560 = vld [vmem:[#allocation5 + $0xde0] sm:$0xff]
    %v561 = vld [vmem:[#allocation5 + $0xde8] sm:$0xff]
    %v562 = vld [vmem:[#allocation5 + $0xdf0] sm:$0xff]
    %v563 = vld [vmem:[#allocation5 + $0xdf8] sm:$0xff]
    %v564 = vld [vmem:[#allocation5 + $0xe00] sm:$0xff]
    %v565 = vld [vmem:[#allocation5 + $0xe08] sm:$0xff]
    %v566 = vld [vmem:[#allocation5 + $0xe10] sm:$0xff]
    %v567 = vld [vmem:[#allocation5 + $0xe18] sm:$0xff]
    %v568 = vld [vmem:[#allocation5 + $0xe20] sm:$0xff]
    %v569 = vld [vmem:[#allocation5 + $0xe28] sm:$0xff]
    %v570 = vld [vmem:[#allocation5 + $0xe30] sm:$0xff]
    %v571 = vld [vmem:[#allocation5 + $0xe38] sm:$0xff]
    %v572 = vld [vmem:[#allocation5 + $0xe40] sm:$0xff]
    %v573 = vld [vmem:[#allocation5 + $0xe48] sm:$0xff]
    %v574 = vld [vmem:[#allocation5 + $0xe50] sm:$0xff]
    %v575 = vld [vmem:[#allocation5 + $0xe58] sm:$0xff]
    %v576 = vld [vmem:[#allocation5 + $0xe60] sm:$0xff]
    %v577 = vld [vmem:[#allocation5 + $0xe68] sm:$0xff]
    %v578 = vld [vmem:[#allocation5 + $0xe70] sm:$0xff]
    %v579 = vld [vmem:[#allocation5 + $0xe78] sm:$0xff]
    %v580 = vld [vmem:[#allocation5 + $0xe80] sm:$0xff]
    %v581 = vld [vmem:[#allocation5 + $0xe88] sm:$0xff]
    %v582 = vld [vmem:[#allocation5 + $0xe90] sm:$0xff]
    %v583 = vld [vmem:[#allocation5 + $0xe98] sm:$0xff]
    %v584 = vld [vmem:[#allocation5 + $0xea0] sm:$0xff]
    %v585 = vld [vmem:[#allocation5 + $0xea8] sm:$0xff]
    %v586 = vld [vmem:[#allocation5 + $0xeb0] sm:$0xff]
    %v587 = vld [vmem:[#allocation5 + $0xeb8] sm:$0xff]
    %v588 = vld [vmem:[#allocation5 + $0xec0] sm:$0xff]
    %v589 = vld [vmem:[#allocation5 + $0xec8] sm:$0xff]
    %v590 = vld [vmem:[#allocation5 + $0xed0] sm:$0xff]
    %v591 = vld [vmem:[#allocation5 + $0xed8] sm:$0xff]
    %v592 = vld [vmem:[#allocation5 + $0xee0] sm:$0xff]
    %v593 = vld [vmem:[#allocation5 + $0xee8] sm:$0xff]
    %v594 = vld [vmem:[#allocation5 + $0xef0] sm:$0xff]
    %v595 = vld [vmem:[#allocation5 + $0xef8] sm:$0xff]
    %v596 = vld [vmem:[#allocation5 + $0xf00] sm:$0xff]
    %v597 = vld [vmem:[#allocation5 + $0xf08] sm:$0xff]
    %v598 = vld [vmem:[#allocation5 + $0xf10] sm:$0xff]
    %v599 = vld [vmem:[#allocation5 + $0xf18] sm:$0xff]
    %v600 = vld [vmem:[#allocation5 + $0xf20] sm:$0xff]
    %v601 = vld [vmem:[#allocation5 + $0xf28] sm:$0xff]
    %v602 = vld [vmem:[#allocation5 + $0xf30] sm:$0xff]
    %v603 = vld [vmem:[#allocation5 + $0xf38] sm:$0xff]
    %v604 = vld [vmem:[#allocation5 + $0xf40] sm:$0xff]
    %v605 = vld [vmem:[#allocation5 + $0xf48] sm:$0xff]
    %v606 = vld [vmem:[#allocation5 + $0xf50] sm:$0xff]
    %v607 = vld [vmem:[#allocation5 + $0xf58] sm:$0xff]
    %v608 = vld [vmem:[#allocation5 + $0xf60] sm:$0xff]
    %v609 = vld [vmem:[#allocation5 + $0xf68] sm:$0xff]
    %v610 = vld [vmem:[#allocation5 + $0xf70] sm:$0xff]
    %v611 = vld [vmem:[#allocation5 + $0xf78] sm:$0xff]
    %v612 = vld [vmem:[#allocation5 + $0xf80] sm:$0xff]
    %v613 = vld [vmem:[#allocation5 + $0xf88] sm:$0xff]
    %v614 = vld [vmem:[#allocation5 + $0xf90] sm:$0xff]
    %v615 = vld [vmem:[#allocation5 + $0xf98] sm:$0xff]
    %v616 = vld [vmem:[#allocation5 + $0xfa0] sm:$0xff]
    %v617 = vld [vmem:[#allocation5 + $0xfa8] sm:$0xff]
    %v618 = vld [vmem:[#allocation5 + $0xfb0] sm:$0xff]
    %v619 = vld [vmem:[#allocation5 + $0xfb8] sm:$0xff]
    %v620 = vld [vmem:[#allocation5 + $0xfc0] sm:$0xff]
    %v621 = vld [vmem:[#allocation5 + $0xfc8] sm:$0xff]
    %v622 = vld [vmem:[#allocation5 + $0xfd0] sm:$0xff]
    %v623 = vld [vmem:[#allocation5 + $0xfd8] sm:$0xff]
    %v624 = vld [vmem:[#allocation5 + $0xfe0] sm:$0xff]
    %v625 = vld [vmem:[#allocation5 + $0xfe8] sm:$0xff]
    %v626 = vld [vmem:[#allocation5 + $0xff0] sm:$0xff]
    %v627 = vld [vmem:[#allocation5 + $0xff8] sm:$0xff]
    %v628 = vld [vmem:[#allocation7] sm:$0xf]
    %v630 = vlaneseq
    %v631 = vshrl.u32 %v630, 7
    %v632 = vsub.s32 0, %v631
    %v633 = vrot.slane %v628, %v632
    %v634 = vlaneseq
    %v635 = vshrl.u32 %v634, 7
    %v636 = vsub.s32 1, %v635
    %v637 = vrot.slane %v628, %v636
    %v638 = vlaneseq
    %v639 = vshrl.u32 %v638, 7
    %v640 = vsub.s32 2, %v639
    %v641 = vrot.slane %v628, %v640
    %v642 = vlaneseq
    %v643 = vshrl.u32 %v642, 7
    %v644 = vsub.s32 3, %v643
    %v645 = vrot.slane %v628, %v644
    %v652 = vcombine.high %v114, %v114
    %v654 = vunpack.c.l.s4 1983009808
    %v655 = vunpack.c.0.s8 %v654
    %v656 = vlaneseq
    %v657 = vshrl.u32 %v656, 7
    %v658 = vsub.s32 %v655, %v657
    %v659 = vrot.slane %v114, %v658
    %v661 = vunpack.c.l.s4 1983009808
    %v662 = vunpack.c.0.s8 %v661
    %v663 = vlaneseq
    %v664 = vshrl.u32 %v663, 7
    %v665 = vsub.s32 %v662, %v664
    %v666 = vrot.slane %v652, %v665
    %v667 = vcombine.high %v659, %v659
    %v668 = vcombine.high %v666, %v666
    %v669 = vcombine.high %v115, %v115
    %v671 = vunpack.c.l.s4 1983009808
    %v672 = vunpack.c.0.s8 %v671
    %v673 = vlaneseq
    %v674 = vshrl.u32 %v673, 7
    %v675 = vsub.s32 %v672, %v674
    %v676 = vrot.slane %v115, %v675
    %v678 = vunpack.c.l.s4 1983009808
    %v679 = vunpack.c.0.s8 %v678
    %v680 = vlaneseq
    %v681 = vshrl.u32 %v680, 7
    %v682 = vsub.s32 %v679, %v681
    %v683 = vrot.slane %v669, %v682
    %v684 = vcombine.high %v676, %v676
    %v685 = vcombine.high %v683, %v683
    %694 = vmatprep.subr.mxu0 %v117
    %695 = vmatpush1.msra.mxu0 %v116
    %696 = vmatprep.subr.mxu0 %v121
    %697 = vmatpush1.msra.mxu0 %v120
    %698 = vmatprep.subr.mxu0 %v125
    %699 = vmatpush1.msra.mxu0 %v124
    %700 = vmatprep.subr.mxu0 %v129
    %701 = vmatpush1.msra.mxu0 %v128
    %702 = vmatprep.subr.mxu0 %v133
    %703 = vmatpush1.msra.mxu0 %v132
    %704 = vmatprep.subr.mxu0 %v137
    %705 = vmatpush1.msra.mxu0 %v136
    %706 = vmatprep.subr.mxu0 %v141
    %707 = vmatpush1.msra.mxu0 %v140
    %708 = vmatprep.subr.mxu0 %v145
    %709 = vmatpush1.msra.mxu0 %v144
    %710 = vmatprep.subr.mxu0 %v149
    %711 = vmatpush1.msra.mxu0 %v148
    %712 = vmatprep.subr.mxu0 %v153
    %713 = vmatpush1.msra.mxu0 %v152
    %714 = vmatprep.subr.mxu0 %v157
    %715 = vmatpush1.msra.mxu0 %v156
    %716 = vmatprep.subr.mxu0 %v161
    %717 = vmatpush1.msra.mxu0 %v160
    %718 = vmatprep.subr.mxu0 %v165
    %719 = vmatpush1.msra.mxu0 %v164
    %720 = vmatprep.subr.mxu0 %v169
    %721 = vmatpush1.msra.mxu0 %v168
    %722 = vmatprep.subr.mxu0 %v173
    %723 = vmatpush1.msra.mxu0 %v172
    %724 = vmatprep.subr.mxu0 %v177
    %725 = vmatpush1.msra.mxu0 %v176
    %726 = vmatprep.subr.mxu0 %v181
    %727 = vmatpush1.msra.mxu0 %v180
    %728 = vmatprep.subr.mxu0 %v185
    %729 = vmatpush1.msra.mxu0 %v184
    %730 = vmatprep.subr.mxu0 %v189
    %731 = vmatpush1.msra.mxu0 %v188
    %732 = vmatprep.subr.mxu0 %v193
    %733 = vmatpush1.msra.mxu0 %v192
    %734 = vmatprep.subr.mxu0 %v197
    %735 = vmatpush1.msra.mxu0 %v196
    %736 = vmatprep.subr.mxu0 %v201
    %737 = vmatpush1.msra.mxu0 %v200
    %738 = vmatprep.subr.mxu0 %v205
    %739 = vmatpush1.msra.mxu0 %v204
    %740 = vmatprep.subr.mxu0 %v209
    %741 = vmatpush1.msra.mxu0 %v208
    %742 = vmatprep.subr.mxu0 %v213
    %743 = vmatpush1.msra.mxu0 %v212
    %744 = vmatprep.subr.mxu0 %v217
    %745 = vmatpush1.msra.mxu0 %v216
    %746 = vmatprep.subr.mxu0 %v221
    %747 = vmatpush1.msra.mxu0 %v220
    %748 = vmatprep.subr.mxu0 %v225
    %749 = vmatpush1.msra.mxu0 %v224
    %750 = vmatprep.subr.mxu0 %v229
    %751 = vmatpush1.msra.mxu0 %v228
    %752 = vmatprep.subr.mxu0 %v233
    %753 = vmatpush1.msra.mxu0 %v232
    %754 = vmatprep.subr.mxu0 %v237
    %755 = vmatpush1.msra.mxu0 %v236
    %756 = vmatprep.subr.mxu0 %v241
    %757 = vmatpush1.msra.mxu0 %v240
    %758 = vmatprep.mubr.f32.mxu0 %v667
    %759 = vmatmul.mubr.f32.gmra.mrb[0].mxu0 %v659
    %v760 = vpop.f32.mrb[0].mxu0
    %v761 = vadd.f32 %v633, %v760
    %v762 = vpop.f32.mrb[0].mxu0
    %v763 = vadd.f32 %v637, %v762
    %764 = vdwg.mxu0
    %765 = vmatprep.subr.mxu0 %v245
    %766 = vmatpush1.msra.mxu0 %v244
    %767 = vmatprep.subr.mxu0 %v249
    %768 = vmatpush1.msra.mxu0 %v248
    %769 = vmatprep.subr.mxu0 %v253
    %770 = vmatpush1.msra.mxu0 %v252
    %771 = vmatprep.subr.mxu0 %v257
    %772 = vmatpush1.msra.mxu0 %v256
    %773 = vmatprep.subr.mxu0 %v261
    %774 = vmatpush1.msra.mxu0 %v260
    %775 = vmatprep.subr.mxu0 %v265
    %776 = vmatpush1.msra.mxu0 %v264
    %777 = vmatprep.subr.mxu0 %v269
    %778 = vmatpush1.msra.mxu0 %v268
    %779 = vmatprep.subr.mxu0 %v273
    %780 = vmatpush1.msra.mxu0 %v272
    %781 = vmatprep.subr.mxu0 %v277
    %782 = vmatpush1.msra.mxu0 %v276
    %783 = vmatprep.subr.mxu0 %v281
    %784 = vmatpush1.msra.mxu0 %v280
    %785 = vmatprep.subr.mxu0 %v285
    %786 = vmatpush1.msra.mxu0 %v284
    %787 = vmatprep.subr.mxu0 %v289
    %788 = vmatpush1.msra.mxu0 %v288
    %789 = vmatprep.subr.mxu0 %v293
    %790 = vmatpush1.msra.mxu0 %v292
    %791 = vmatprep.subr.mxu0 %v297
    %792 = vmatpush1.msra.mxu0 %v296
    %793 = vmatprep.subr.mxu0 %v301
    %794 = vmatpush1.msra.mxu0 %v300
    %795 = vmatprep.subr.mxu0 %v305
    %796 = vmatpush1.msra.mxu0 %v304
    %797 = vmatprep.subr.mxu0 %v309
    %798 = vmatpush1.msra.mxu0 %v308
    %799 = vmatprep.subr.mxu0 %v313
    %800 = vmatpush1.msra.mxu0 %v312
    %801 = vmatprep.subr.mxu0 %v317
    %802 = vmatpush1.msra.mxu0 %v316
    %803 = vmatprep.subr.mxu0 %v321
    %804 = vmatpush1.msra.mxu0 %v320
    %805 = vmatprep.subr.mxu0 %v325
    %806 = vmatpush1.msra.mxu0 %v324
    %807 = vmatprep.subr.mxu0 %v329
    %808 = vmatpush1.msra.mxu0 %v328
    %809 = vmatprep.subr.mxu0 %v333
    %810 = vmatpush1.msra.mxu0 %v332
    %811 = vmatprep.subr.mxu0 %v337
    %812 = vmatpush1.msra.mxu0 %v336
    %813 = vmatprep.subr.mxu0 %v341
    %814 = vmatpush1.msra.mxu0 %v340
    %815 = vmatprep.subr.mxu0 %v345
    %816 = vmatpush1.msra.mxu0 %v344
    %817 = vmatprep.subr.mxu0 %v349
    %818 = vmatpush1.msra.mxu0 %v348
    %819 = vmatprep.subr.mxu0 %v353
    %820 = vmatpush1.msra.mxu0 %v352
    %821 = vmatprep.subr.mxu0 %v357
    %822 = vmatpush1.msra.mxu0 %v356
    %823 = vmatprep.subr.mxu0 %v361
    %824 = vmatpush1.msra.mxu0 %v360
    %825 = vmatprep.subr.mxu0 %v365
    %826 = vmatpush1.msra.mxu0 %v364
    %827 = vmatprep.subr.mxu0 %v369
    %828 = vmatpush1.msra.mxu0 %v368
    %829 = vmatprep.mubr.f32.mxu0 %v668
    %830 = vmatmul.mubr.f32.gmra.mrb[0].mxu0 %v666
    %v831 = vpop.f32.mrb[0].mxu0
    %v832 = vadd.f32 %v761, %v831
    %v833 = vpop.f32.mrb[0].mxu0
    %v834 = vadd.f32 %v763, %v833
    %835 = vdwg.mxu0
    %836 = vmatprep.subr.mxu0 %v373
    %837 = vmatpush1.msra.mxu0 %v372
    %838 = vmatprep.subr.mxu0 %v377
    %839 = vmatpush1.msra.mxu0 %v376
    %840 = vmatprep.subr.mxu0 %v381
    %841 = vmatpush1.msra.mxu0 %v380
    %842 = vmatprep.subr.mxu0 %v385
    %843 = vmatpush1.msra.mxu0 %v384
    %844 = vmatprep.subr.mxu0 %v389
    %845 = vmatpush1.msra.mxu0 %v388
    %846 = vmatprep.subr.mxu0 %v393
    %847 = vmatpush1.msra.mxu0 %v392
    %848 = vmatprep.subr.mxu0 %v397
    %849 = vmatpush1.msra.mxu0 %v396
    %850 = vmatprep.subr.mxu0 %v401
    %851 = vmatpush1.msra.mxu0 %v400
    %852 = vmatprep.subr.mxu0 %v405
    %853 = vmatpush1.msra.mxu0 %v404
    %854 = vmatprep.subr.mxu0 %v409
    %855 = vmatpush1.msra.mxu0 %v408
    %856 = vmatprep.subr.mxu0 %v413
    %857 = vmatpush1.msra.mxu0 %v412
    %858 = vmatprep.subr.mxu0 %v417
    %859 = vmatpush1.msra.mxu0 %v416
    %860 = vmatprep.subr.mxu0 %v421
    %861 = vmatpush1.msra.mxu0 %v420
    %862 = vmatprep.subr.mxu0 %v425
    %863 = vmatpush1.msra.mxu0 %v424
    %864 = vmatprep.subr.mxu0 %v429
    %865 = vmatpush1.msra.mxu0 %v428
    %866 = vmatprep.subr.mxu0 %v433
    %867 = vmatpush1.msra.mxu0 %v432
    %868 = vmatprep.subr.mxu0 %v437
    %869 = vmatpush1.msra.mxu0 %v436
    %870 = vmatprep.subr.mxu0 %v441
    %871 = vmatpush1.msra.mxu0 %v440
    %872 = vmatprep.subr.mxu0 %v445
    %873 = vmatpush1.msra.mxu0 %v444
    %874 = vmatprep.subr.mxu0 %v449
    %875 = vmatpush1.msra.mxu0 %v448
    %876 = vmatprep.subr.mxu0 %v453
    %877 = vmatpush1.msra.mxu0 %v452
    %878 = vmatprep.subr.mxu0 %v457
    %879 = vmatpush1.msra.mxu0 %v456
    %880 = vmatprep.subr.mxu0 %v461
    %881 = vmatpush1.msra.mxu0 %v460
    %882 = vmatprep.subr.mxu0 %v465
    %883 = vmatpush1.msra.mxu0 %v464
    %884 = vmatprep.subr.mxu0 %v469
    %885 = vmatpush1.msra.mxu0 %v468
    %886 = vmatprep.subr.mxu0 %v473
    %887 = vmatpush1.msra.mxu0 %v472
    %888 = vmatprep.subr.mxu0 %v477
    %889 = vmatpush1.msra.mxu0 %v476
    %890 = vmatprep.subr.mxu0 %v481
    %891 = vmatpush1.msra.mxu0 %v480
    %892 = vmatprep.subr.mxu0 %v485
    %893 = vmatpush1.msra.mxu0 %v484
    %894 = vmatprep.subr.mxu0 %v489
    %895 = vmatpush1.msra.mxu0 %v488
    %896 = vmatprep.subr.mxu0 %v493
    %897 = vmatpush1.msra.mxu0 %v492
    %898 = vmatprep.subr.mxu0 %v497
    %899 = vmatpush1.msra.mxu0 %v496
    %900 = vmatprep.mubr.f32.mxu0 %v684
    %901 = vmatmul.mubr.f32.gmra.mrb[0].mxu0 %v676
    %v902 = vpop.f32.mrb[0].mxu0
    %v903 = vadd.f32 %v832, %v902
    %v904 = vpop.f32.mrb[0].mxu0
    %v905 = vadd.f32 %v834, %v904
    %906 = vdwg.mxu0
    %907 = vmatprep.subr.mxu0 %v501
    %908 = vmatpush1.msra.mxu0 %v500
    %909 = vmatprep.subr.mxu0 %v505
    %910 = vmatpush1.msra.mxu0 %v504
    %911 = vmatprep.subr.mxu0 %v509
    %912 = vmatpush1.msra.mxu0 %v508
    %913 = vmatprep.subr.mxu0 %v513
    %914 = vmatpush1.msra.mxu0 %v512
    %915 = vmatprep.subr.mxu0 %v517
    %916 = vmatpush1.msra.mxu0 %v516
    %917 = vmatprep.subr.mxu0 %v521
    %918 = vmatpush1.msra.mxu0 %v520
    %919 = vmatprep.subr.mxu0 %v525
    %920 = vmatpush1.msra.mxu0 %v524
    %921 = vmatprep.subr.mxu0 %v529
    %922 = vmatpush1.msra.mxu0 %v528
    %923 = vmatprep.subr.mxu0 %v533
    %924 = vmatpush1.msra.mxu0 %v532
    %925 = vmatprep.subr.mxu0 %v537
    %926 = vmatpush1.msra.mxu0 %v536
    %927 = vmatprep.subr.mxu0 %v541
    %928 = vmatpush1.msra.mxu0 %v540
    %929 = vmatprep.subr.mxu0 %v545
    %930 = vmatpush1.msra.mxu0 %v544
    %931 = vmatprep.subr.mxu0 %v549
    %932 = vmatpush1.msra.mxu0 %v548
    %933 = vmatprep.subr.mxu0 %v553
    %934 = vmatpush1.msra.mxu0 %v552
    %935 = vmatprep.subr.mxu0 %v557
    %936 = vmatpush1.msra.mxu0 %v556
    %937 = vmatprep.subr.mxu0 %v561
    %938 = vmatpush1.msra.mxu0 %v560
    %939 = vmatprep.subr.mxu0 %v565
    %940 = vmatpush1.msra.mxu0 %v564
    %941 = vmatprep.subr.mxu0 %v569
    %942 = vmatpush1.msra.mxu0 %v568
    %943 = vmatprep.subr.mxu0 %v573
    %944 = vmatpush1.msra.mxu0 %v572
    %945 = vmatprep.subr.mxu0 %v577
    %946 = vmatpush1.msra.mxu0 %v576
    %947 = vmatprep.subr.mxu0 %v581
    %948 = vmatpush1.msra.mxu0 %v580
    %949 = vmatprep.subr.mxu0 %v585
    %950 = vmatpush1.msra.mxu0 %v584
    %951 = vmatprep.subr.mxu0 %v589
    %952 = vmatpush1.msra.mxu0 %v588
    %953 = vmatprep.subr.mxu0 %v593
    %954 = vmatpush1.msra.mxu0 %v592
    %955 = vmatprep.subr.mxu0 %v597
    %956 = vmatpush1.msra.mxu0 %v596
    %957 = vmatprep.subr.mxu0 %v601
    %958 = vmatpush1.msra.mxu0 %v600
    %959 = vmatprep.subr.mxu0 %v605
    %960 = vmatpush1.msra.mxu0 %v604
    %961 = vmatprep.subr.mxu0 %v609
    %962 = vmatpush1.msra.mxu0 %v608
    %963 = vmatprep.subr.mxu0 %v613
    %964 = vmatpush1.msra.mxu0 %v612
    %965 = vmatprep.subr.mxu0 %v617
    %966 = vmatpush1.msra.mxu0 %v616
    %967 = vmatprep.subr.mxu0 %v621
    %968 = vmatpush1.msra.mxu0 %v620
    %969 = vmatprep.subr.mxu0 %v625
    %970 = vmatpush1.msra.mxu0 %v624
    %971 = vmatprep.mubr.f32.mxu0 %v685
    %972 = vmatmul.mubr.f32.gmra.mrb[0].mxu0 %v683
    %v973 = vpop.f32.mrb[0].mxu0
    %v974 = vadd.f32 %v903, %v973
    %v975 = vpop.f32.mrb[0].mxu0
    %v976 = vadd.f32 %v905, %v975
    %977 = vdwg.mxu0
    %978 = vmatprep.subr.mxu0 %v119
    %979 = vmatpush1.msra.mxu0 %v118
    %980 = vmatprep.subr.mxu0 %v123
    %981 = vmatpush1.msra.mxu0 %v122
    %982 = vmatprep.subr.mxu0 %v127
    %983 = vmatpush1.msra.mxu0 %v126
    %984 = vmatprep.subr.mxu0 %v131
    %985 = vmatpush1.msra.mxu0 %v130
    %986 = vmatprep.subr.mxu0 %v135
    %987 = vmatpush1.msra.mxu0 %v134
    %988 = vmatprep.subr.mxu0 %v139
    %989 = vmatpush1.msra.mxu0 %v138
    %990 = vmatprep.subr.mxu0 %v143
    %991 = vmatpush1.msra.mxu0 %v142
    %992 = vmatprep.subr.mxu0 %v147
    %993 = vmatpush1.msra.mxu0 %v146
    %994 = vmatprep.subr.mxu0 %v151
    %995 = vmatpush1.msra.mxu0 %v150
    %996 = vmatprep.subr.mxu0 %v155
    %997 = vmatpush1.msra.mxu0 %v154
    %998 = vmatprep.subr.mxu0 %v159
    %999 = vmatpush1.msra.mxu0 %v158
    %1000 = vmatprep.subr.mxu0 %v163
    %1001 = vmatpush1.msra.mxu0 %v162
    %1002 = vmatprep.subr.mxu0 %v167
    %1003 = vmatpush1.msra.mxu0 %v166
    %1004 = vmatprep.subr.mxu0 %v171
    %1005 = vmatpush1.msra.mxu0 %v170
    %1006 = vmatprep.subr.mxu0 %v175
    %1007 = vmatpush1.msra.mxu0 %v174
    %1008 = vmatprep.subr.mxu0 %v179
    %1009 = vmatpush1.msra.mxu0 %v178
    %1010 = vmatprep.subr.mxu0 %v183
    %1011 = vmatpush1.msra.mxu0 %v182
    %1012 = vmatprep.subr.mxu0 %v187
    %1013 = vmatpush1.msra.mxu0 %v186
    %1014 = vmatprep.subr.mxu0 %v191
    %1015 = vmatpush1.msra.mxu0 %v190
    %1016 = vmatprep.subr.mxu0 %v195
    %1017 = vmatpush1.msra.mxu0 %v194
    %1018 = vmatprep.subr.mxu0 %v199
    %1019 = vmatpush1.msra.mxu0 %v198
    %1020 = vmatprep.subr.mxu0 %v203
    %1021 = vmatpush1.msra.mxu0 %v202
    %1022 = vmatprep.subr.mxu0 %v207
    %1023 = vmatpush1.msra.mxu0 %v206
    %1024 = vmatprep.subr.mxu0 %v211
    %1025 = vmatpush1.msra.mxu0 %v210
    %1026 = vmatprep.subr.mxu0 %v215
    %1027 = vmatpush1.msra.mxu0 %v214
    %1028 = vmatprep.subr.mxu0 %v219
    %1029 = vmatpush1.msra.mxu0 %v218
    %1030 = vmatprep.subr.mxu0 %v223
    %1031 = vmatpush1.msra.mxu0 %v222
    %1032 = vmatprep.subr.mxu0 %v227
    %1033 = vmatpush1.msra.mxu0 %v226
    %1034 = vmatprep.subr.mxu0 %v231
    %1035 = vmatpush1.msra.mxu0 %v230
    %1036 = vmatprep.subr.mxu0 %v235
    %1037 = vmatpush1.msra.mxu0 %v234
    %1038 = vmatprep.subr.mxu0 %v239
    %1039 = vmatpush1.msra.mxu0 %v238
    %1040 = vmatprep.subr.mxu0 %v243
    %1041 = vmatpush1.msra.mxu0 %v242
    %1042 = vmatprep.mubr.f32.mxu0 %v667
    %1043 = vmatmul.mubr.f32.gmra.mrb[0].mxu0 %v659
    %v1044 = vpop.f32.mrb[0].mxu0
    %v1045 = vadd.f32 %v641, %v1044
    %v1046 = vpop.f32.mrb[0].mxu0
    %v1047 = vadd.f32 %v645, %v1046
    %1048 = vdwg.mxu0
    %1049 = vmatprep.subr.mxu0 %v247
    %1050 = vmatpush1.msra.mxu0 %v246
    %1051 = vmatprep.subr.mxu0 %v251
    %1052 = vmatpush1.msra.mxu0 %v250
    %1053 = vmatprep.subr.mxu0 %v255
    %1054 = vmatpush1.msra.mxu0 %v254
    %1055 = vmatprep.subr.mxu0 %v259
    %1056 = vmatpush1.msra.mxu0 %v258
    %1057 = vmatprep.subr.mxu0 %v263
    %1058 = vmatpush1.msra.mxu0 %v262
    %1059 = vmatprep.subr.mxu0 %v267
    %1060 = vmatpush1.msra.mxu0 %v266
    %1061 = vmatprep.subr.mxu0 %v271
    %1062 = vmatpush1.msra.mxu0 %v270
    %1063 = vmatprep.subr.mxu0 %v275
    %1064 = vmatpush1.msra.mxu0 %v274
    %1065 = vmatprep.subr.mxu0 %v279
    %1066 = vmatpush1.msra.mxu0 %v278
    %1067 = vmatprep.subr.mxu0 %v283
    %1068 = vmatpush1.msra.mxu0 %v282
    %1069 = vmatprep.subr.mxu0 %v287
    %1070 = vmatpush1.msra.mxu0 %v286
    %1071 = vmatprep.subr.mxu0 %v291
    %1072 = vmatpush1.msra.mxu0 %v290
    %1073 = vmatprep.subr.mxu0 %v295
    %1074 = vmatpush1.msra.mxu0 %v294
    %1075 = vmatprep.subr.mxu0 %v299
    %1076 = vmatpush1.msra.mxu0 %v298
    %1077 = vmatprep.subr.mxu0 %v303
    %1078 = vmatpush1.msra.mxu0 %v302
    %1079 = vmatprep.subr.mxu0 %v307
    %1080 = vmatpush1.msra.mxu0 %v306
    %1081 = vmatprep.subr.mxu0 %v311
    %1082 = vmatpush1.msra.mxu0 %v310
    %1083 = vmatprep.subr.mxu0 %v315
    %1084 = vmatpush1.msra.mxu0 %v314
    %1085 = vmatprep.subr.mxu0 %v319
    %1086 = vmatpush1.msra.mxu0 %v318
    %1087 = vmatprep.subr.mxu0 %v323
    %1088 = vmatpush1.msra.mxu0 %v322
    %1089 = vmatprep.subr.mxu0 %v327
    %1090 = vmatpush1.msra.mxu0 %v326
    %1091 = vmatprep.subr.mxu0 %v331
    %1092 = vmatpush1.msra.mxu0 %v330
    %1093 = vmatprep.subr.mxu0 %v335
    %1094 = vmatpush1.msra.mxu0 %v334
    %1095 = vmatprep.subr.mxu0 %v339
    %1096 = vmatpush1.msra.mxu0 %v338
    %1097 = vmatprep.subr.mxu0 %v343
    %1098 = vmatpush1.msra.mxu0 %v342
    %1099 = vmatprep.subr.mxu0 %v347
    %1100 = vmatpush1.msra.mxu0 %v346
    %1101 = vmatprep.subr.mxu0 %v351
    %1102 = vmatpush1.msra.mxu0 %v350
    %1103 = vmatprep.subr.mxu0 %v355
    %1104 = vmatpush1.msra.mxu0 %v354
    %1105 = vmatprep.subr.mxu0 %v359
    %1106 = vmatpush1.msra.mxu0 %v358
    %1107 = vmatprep.subr.mxu0 %v363
    %1108 = vmatpush1.msra.mxu0 %v362
    %1109 = vmatprep.subr.mxu0 %v367
    %1110 = vmatpush1.msra.mxu0 %v366
    %1111 = vmatprep.subr.mxu0 %v371
    %1112 = vmatpush1.msra.mxu0 %v370
    %1113 = vmatprep.mubr.f32.mxu0 %v668
    %1114 = vmatmul.mubr.f32.gmra.mrb[0].mxu0 %v666
    %v1115 = vpop.f32.mrb[0].mxu0
    %v1116 = vadd.f32 %v1045, %v1115
    %v1117 = vpop.f32.mrb[0].mxu0
    %v1118 = vadd.f32 %v1047, %v1117
    %1119 = vdwg.mxu0
    %1120 = vmatprep.subr.mxu0 %v375
    %1121 = vmatpush1.msra.mxu0 %v374
    %1122 = vmatprep.subr.mxu0 %v379
    %1123 = vmatpush1.msra.mxu0 %v378
    %1124 = vmatprep.subr.mxu0 %v383
    %1125 = vmatpush1.msra.mxu0 %v382
    %1126 = vmatprep.subr.mxu0 %v387
    %1127 = vmatpush1.msra.mxu0 %v386
    %1128 = vmatprep.subr.mxu0 %v391
    %1129 = vmatpush1.msra.mxu0 %v390
    %1130 = vmatprep.subr.mxu0 %v395
    %1131 = vmatpush1.msra.mxu0 %v394
    %1132 = vmatprep.subr.mxu0 %v399
    %1133 = vmatpush1.msra.mxu0 %v398
    %1134 = vmatprep.subr.mxu0 %v403
    %1135 = vmatpush1.msra.mxu0 %v402
    %1136 = vmatprep.subr.mxu0 %v407
    %1137 = vmatpush1.msra.mxu0 %v406
    %1138 = vmatprep.subr.mxu0 %v411
    %1139 = vmatpush1.msra.mxu0 %v410
    %1140 = vmatprep.subr.mxu0 %v415
    %1141 = vmatpush1.msra.mxu0 %v414
    %1142 = vmatprep.subr.mxu0 %v419
    %1143 = vmatpush1.msra.mxu0 %v418
    %1144 = vmatprep.subr.mxu0 %v423
    %1145 = vmatpush1.msra.mxu0 %v422
    %1146 = vmatprep.subr.mxu0 %v427
    %1147 = vmatpush1.msra.mxu0 %v426
    %1148 = vmatprep.subr.mxu0 %v431
    %1149 = vmatpush1.msra.mxu0 %v430
    %1150 = vmatprep.subr.mxu0 %v435
    %1151 = vmatpush1.msra.mxu0 %v434
    %1152 = vmatprep.subr.mxu0 %v439
    %1153 = vmatpush1.msra.mxu0 %v438
    %1154 = vmatprep.subr.mxu0 %v443
    %1155 = vmatpush1.msra.mxu0 %v442
    %1156 = vmatprep.subr.mxu0 %v447
    %1157 = vmatpush1.msra.mxu0 %v446
    %1158 = vmatprep.subr.mxu0 %v451
    %1159 = vmatpush1.msra.mxu0 %v450
    %1160 = vmatprep.subr.mxu0 %v455
    %1161 = vmatpush1.msra.mxu0 %v454
    %1162 = vmatprep.subr.mxu0 %v459
    %1163 = vmatpush1.msra.mxu0 %v458
    %1164 = vmatprep.subr.mxu0 %v463
    %1165 = vmatpush1.msra.mxu0 %v462
    %1166 = vmatprep.subr.mxu0 %v467
    %1167 = vmatpush1.msra.mxu0 %v466
    %1168 = vmatprep.subr.mxu0 %v471
    %1169 = vmatpush1.msra.mxu0 %v470
    %1170 = vmatprep.subr.mxu0 %v475
    %1171 = vmatpush1.msra.mxu0 %v474
    %1172 = vmatprep.subr.mxu0 %v479
    %1173 = vmatpush1.msra.mxu0 %v478
    %1174 = vmatprep.subr.mxu0 %v483
    %1175 = vmatpush1.msra.mxu0 %v482
    %1176 = vmatprep.subr.mxu0 %v487
    %1177 = vmatpush1.msra.mxu0 %v486
    %1178 = vmatprep.subr.mxu0 %v491
    %1179 = vmatpush1.msra.mxu0 %v490
    %1180 = vmatprep.subr.mxu0 %v495
    %1181 = vmatpush1.msra.mxu0 %v494
    %1182 = vmatprep.subr.mxu0 %v499
    %1183 = vmatpush1.msra.mxu0 %v498
    %1184 = vmatprep.mubr.f32.mxu0 %v684
    %1185 = vmatmul.mubr.f32.gmra.mrb[0].mxu0 %v676
    %v1186 = vpop.f32.mrb[0].mxu0
    %v1187 = vadd.f32 %v1116, %v1186
    %v1188 = vpop.f32.mrb[0].mxu0
    %v1189 = vadd.f32 %v1118, %v1188
    %1190 = vdwg.mxu0
    %1191 = vmatprep.subr.mxu0 %v503
    %1192 = vmatpush1.msra.mxu0 %v502
    %1193 = vmatprep.subr.mxu0 %v507
    %1194 = vmatpush1.msra.mxu0 %v506
    %1195 = vmatprep.subr.mxu0 %v511
    %1196 = vmatpush1.msra.mxu0 %v510
    %1197 = vmatprep.subr.mxu0 %v515
    %1198 = vmatpush1.msra.mxu0 %v514
    %1199 = vmatprep.subr.mxu0 %v519
    %1200 = vmatpush1.msra.mxu0 %v518
    %1201 = vmatprep.subr.mxu0 %v523
    %1202 = vmatpush1.msra.mxu0 %v522
    %1203 = vmatprep.subr.mxu0 %v527
    %1204 = vmatpush1.msra.mxu0 %v526
    %1205 = vmatprep.subr.mxu0 %v531
    %1206 = vmatpush1.msra.mxu0 %v530
    %1207 = vmatprep.subr.mxu0 %v535
    %1208 = vmatpush1.msra.mxu0 %v534
    %1209 = vmatprep.subr.mxu0 %v539
    %1210 = vmatpush1.msra.mxu0 %v538
    %1211 = vmatprep.subr.mxu0 %v543
    %1212 = vmatpush1.msra.mxu0 %v542
    %1213 = vmatprep.subr.mxu0 %v547
    %1214 = vmatpush1.msra.mxu0 %v546
    %1215 = vmatprep.subr.mxu0 %v551
    %1216 = vmatpush1.msra.mxu0 %v550
    %1217 = vmatprep.subr.mxu0 %v555
    %1218 = vmatpush1.msra.mxu0 %v554
    %1219 = vmatprep.subr.mxu0 %v559
    %1220 = vmatpush1.msra.mxu0 %v558
    %1221 = vmatprep.subr.mxu0 %v563
    %1222 = vmatpush1.msra.mxu0 %v562
    %1223 = vmatprep.subr.mxu0 %v567
    %1224 = vmatpush1.msra.mxu0 %v566
    %1225 = vmatprep.subr.mxu0 %v571
    %1226 = vmatpush1.msra.mxu0 %v570
    %1227 = vmatprep.subr.mxu0 %v575
    %1228 = vmatpush1.msra.mxu0 %v574
    %1229 = vmatprep.subr.mxu0 %v579
    %1230 = vmatpush1.msra.mxu0 %v578
    %1231 = vmatprep.subr.mxu0 %v583
    %1232 = vmatpush1.msra.mxu0 %v582
    %1233 = vmatprep.subr.mxu0 %v587
    %1234 = vmatpush1.msra.mxu0 %v586
    %1235 = vmatprep.subr.mxu0 %v591
    %1236 = vmatpush1.msra.mxu0 %v590
    %1237 = vmatprep.subr.mxu0 %v595
    %1238 = vmatpush1.msra.mxu0 %v594
    %1239 = vmatprep.subr.mxu0 %v599
    %1240 = vmatpush1.msra.mxu0 %v598
    %1241 = vmatprep.subr.mxu0 %v603
    %1242 = vmatpush1.msra.mxu0 %v602
    %1243 = vmatprep.subr.mxu0 %v607
    %1244 = vmatpush1.msra.mxu0 %v606
    %1245 = vmatprep.subr.mxu0 %v611
    %1246 = vmatpush1.msra.mxu0 %v610
    %1247 = vmatprep.subr.mxu0 %v615
    %1248 = vmatpush1.msra.mxu0 %v614
    %1249 = vmatprep.subr.mxu0 %v619
    %1250 = vmatpush1.msra.mxu0 %v618
    %1251 = vmatprep.subr.mxu0 %v623
    %1252 = vmatpush1.msra.mxu0 %v622
    %1253 = vmatprep.subr.mxu0 %v627
    %1254 = vmatpush1.msra.mxu0 %v626
    %1255 = vmatprep.mubr.f32.mxu0 %v685
    %1256 = vmatmul.mubr.f32.gmra.mrb[0].mxu0 %v683
    %v1257 = vpop.f32.mrb[0].mxu0
    %v1258 = vadd.f32 %v1187, %v1257
    %v1259 = vpop.f32.mrb[0].mxu0
    %v1260 = vadd.f32 %v1189, %v1259
    %1261 = vdwg.mxu0
    %v1262 = vmax.f32 %v974, 0.0
    %v1263 = vmax.f32 %v976, 0.0
    %v1264 = vmax.f32 %v1258, 0.0
    %v1265 = vmax.f32 %v1260, 0.0
    %v1266 = vld [vmem:[#allocation8] sm:$0xff]
    %v1267 = vld [vmem:[#allocation8 + $0x8] sm:$0xff]
    %v1268 = vld [vmem:[#allocation8 + $0x10] sm:$0xff]
    %v1269 = vld [vmem:[#allocation8 + $0x18] sm:$0xff]
    %v1270 = vld [vmem:[#allocation8 + $0x20] sm:$0xff]
    %v1271 = vld [vmem:[#allocation8 + $0x28] sm:$0xff]
    %v1272 = vld [vmem:[#allocation8 + $0x30] sm:$0xff]
    %v1273 = vld [vmem:[#allocation8 + $0x38] sm:$0xff]
    %v1274 = vld [vmem:[#allocation8 + $0x40] sm:$0xff]
    %v1275 = vld [vmem:[#allocation8 + $0x48] sm:$0xff]
    %v1276 = vld [vmem:[#allocation8 + $0x50] sm:$0xff]
    %v1277 = vld [vmem:[#allocation8 + $0x58] sm:$0xff]
    %v1278 = vld [vmem:[#allocation8 + $0x60] sm:$0xff]
    %v1279 = vld [vmem:[#allocation8 + $0x68] sm:$0xff]
    %v1280 = vld [vmem:[#allocation8 + $0x70] sm:$0xff]
    %v1281 = vld [vmem:[#allocation8 + $0x78] sm:$0xff]
    %v1282 = vld [vmem:[#allocation8 + $0x80] sm:$0xff]
    %v1283 = vld [vmem:[#allocation8 + $0x88] sm:$0xff]
    %v1284 = vld [vmem:[#allocation8 + $0x90] sm:$0xff]
    %v1285 = vld [vmem:[#allocation8 + $0x98] sm:$0xff]
    %v1286 = vld [vmem:[#allocation8 + $0xa0] sm:$0xff]
    %v1287 = vld [vmem:[#allocation8 + $0xa8] sm:$0xff]
    %v1288 = vld [vmem:[#allocation8 + $0xb0] sm:$0xff]
    %v1289 = vld [vmem:[#allocation8 + $0xb8] sm:$0xff]
    %v1290 = vld [vmem:[#allocation8 + $0xc0] sm:$0xff]
    %v1291 = vld [vmem:[#allocation8 + $0xc8] sm:$0xff]
    %v1292 = vld [vmem:[#allocation8 + $0xd0] sm:$0xff]
    %v1293 = vld [vmem:[#allocation8 + $0xd8] sm:$0xff]
    %v1294 = vld [vmem:[#allocation8 + $0xe0] sm:$0xff]
    %v1295 = vld [vmem:[#allocation8 + $0xe8] sm:$0xff]
    %v1296 = vld [vmem:[#allocation8 + $0xf0] sm:$0xff]
    %v1297 = vld [vmem:[#allocation8 + $0xf8] sm:$0xff]
    %v1298 = vld [vmem:[#allocation8 + $0x100] sm:$0xff]
    %v1299 = vld [vmem:[#allocation8 + $0x108] sm:$0xff]
    %v1300 = vld [vmem:[#allocation8 + $0x110] sm:$0xff]
    %v1301 = vld [vmem:[#allocation8 + $0x118] sm:$0xff]
    %v1302 = vld [vmem:[#allocation8 + $0x120] sm:$0xff]
    %v1303 = vld [vmem:[#allocation8 + $0x128] sm:$0xff]
    %v1304 = vld [vmem:[#allocation8 + $0x130] sm:$0xff]
    %v1305 = vld [vmem:[#allocation8 + $0x138] sm:$0xff]
    %v1306 = vld [vmem:[#allocation8 + $0x140] sm:$0xff]
    %v1307 = vld [vmem:[#allocation8 + $0x148] sm:$0xff]
    %v1308 = vld [vmem:[#allocation8 + $0x150] sm:$0xff]
    %v1309 = vld [vmem:[#allocation8 + $0x158] sm:$0xff]
    %v1310 = vld [vmem:[#allocation8 + $0x160] sm:$0xff]
    %v1311 = vld [vmem:[#allocation8 + $0x168] sm:$0xff]
    %v1312 = vld [vmem:[#allocation8 + $0x170] sm:$0xff]
    %v1313 = vld [vmem:[#allocation8 + $0x178] sm:$0xff]
    %v1314 = vld [vmem:[#allocation8 + $0x180] sm:$0xff]
    %v1315 = vld [vmem:[#allocation8 + $0x188] sm:$0xff]
    %v1316 = vld [vmem:[#allocation8 + $0x190] sm:$0xff]
    %v1317 = vld [vmem:[#allocation8 + $0x198] sm:$0xff]
    %v1318 = vld [vmem:[#allocation8 + $0x1a0] sm:$0xff]
    %v1319 = vld [vmem:[#allocation8 + $0x1a8] sm:$0xff]
    %v1320 = vld [vmem:[#allocation8 + $0x1b0] sm:$0xff]
    %v1321 = vld [vmem:[#allocation8 + $0x1b8] sm:$0xff]
    %v1322 = vld [vmem:[#allocation8 + $0x1c0] sm:$0xff]
    %v1323 = vld [vmem:[#allocation8 + $0x1c8] sm:$0xff]
    %v1324 = vld [vmem:[#allocation8 + $0x1d0] sm:$0xff]
    %v1325 = vld [vmem:[#allocation8 + $0x1d8] sm:$0xff]
    %v1326 = vld [vmem:[#allocation8 + $0x1e0] sm:$0xff]
    %v1327 = vld [vmem:[#allocation8 + $0x1e8] sm:$0xff]
    %v1328 = vld [vmem:[#allocation8 + $0x1f0] sm:$0xff]
    %v1329 = vld [vmem:[#allocation8 + $0x1f8] sm:$0xff]
    %v1330 = vld [vmem:[#allocation10] sm:$0x1]
    %v1332 = vlaneseq
    %v1333 = vshrl.u32 %v1332, 7
    %v1334 = vsub.s32 0, %v1333
    %v1335 = vrot.slane %v1330, %v1334
    %1337 = vmatprep.subr.mxu0 0.0
    %1338 = vmatpush1.msra.mxu0 %v1266
    %1339 = vmatprep.subr.mxu0 0.0
    %1340 = vmatpush1.msra.mxu0 %v1267
    %1341 = vmatprep.subr.mxu0 0.0
    %1342 = vmatpush1.msra.mxu0 %v1268
    %1343 = vmatprep.subr.mxu0 0.0
    %1344 = vmatpush1.msra.mxu0 %v1269
    %1345 = vmatprep.subr.mxu0 0.0
    %1346 = vmatpush1.msra.mxu0 %v1270
    %1347 = vmatprep.subr.mxu0 0.0
    %1348 = vmatpush1.msra.mxu0 %v1271
    %1349 = vmatprep.subr.mxu0 0.0
    %1350 = vmatpush1.msra.mxu0 %v1272
    %1351 = vmatprep.subr.mxu0 0.0
    %1352 = vmatpush1.msra.mxu0 %v1273
    %1353 = vmatprep.subr.mxu0 0.0
    %1354 = vmatpush1.msra.mxu0 %v1274
    %1355 = vmatprep.subr.mxu0 0.0
    %1356 = vmatpush1.msra.mxu0 %v1275
    %1357 = vmatprep.subr.mxu0 0.0
    %1358 = vmatpush1.msra.mxu0 %v1276
    %1359 = vmatprep.subr.mxu0 0.0
    %1360 = vmatpush1.msra.mxu0 %v1277
    %1361 = vmatprep.subr.mxu0 0.0
    %1362 = vmatpush1.msra.mxu0 %v1278
    %1363 = vmatprep.subr.mxu0 0.0
    %1364 = vmatpush1.msra.mxu0 %v1279
    %1365 = vmatprep.subr.mxu0 0.0
    %1366 = vmatpush1.msra.mxu0 %v1280
    %1367 = vmatprep.subr.mxu0 0.0
    %1368 = vmatpush1.msra.mxu0 %v1281
    %1369 = vmatprep.subr.mxu0 0.0
    %1370 = vmatpush1.msra.mxu0 %v1282
    %1371 = vmatprep.subr.mxu0 0.0
    %1372 = vmatpush1.msra.mxu0 %v1283
    %1373 = vmatprep.subr.mxu0 0.0
    %1374 = vmatpush1.msra.mxu0 %v1284
    %1375 = vmatprep.subr.mxu0 0.0
    %1376 = vmatpush1.msra.mxu0 %v1285
    %1377 = vmatprep.subr.mxu0 0.0
    %1378 = vmatpush1.msra.mxu0 %v1286
    %1379 = vmatprep.subr.mxu0 0.0
    %1380 = vmatpush1.msra.mxu0 %v1287
    %1381 = vmatprep.subr.mxu0 0.0
    %1382 = vmatpush1.msra.mxu0 %v1288
    %1383 = vmatprep.subr.mxu0 0.0
    %1384 = vmatpush1.msra.mxu0 %v1289
    %1385 = vmatprep.subr.mxu0 0.0
    %1386 = vmatpush1.msra.mxu0 %v1290
    %1387 = vmatprep.subr.mxu0 0.0
    %1388 = vmatpush1.msra.mxu0 %v1291
    %1389 = vmatprep.subr.mxu0 0.0
    %1390 = vmatpush1.msra.mxu0 %v1292
    %1391 = vmatprep.subr.mxu0 0.0
    %1392 = vmatpush1.msra.mxu0 %v1293
    %1393 = vmatprep.subr.mxu0 0.0
    %1394 = vmatpush1.msra.mxu0 %v1294
    %1395 = vmatprep.subr.mxu0 0.0
    %1396 = vmatpush1.msra.mxu0 %v1295
    %1397 = vmatprep.subr.mxu0 0.0
    %1398 = vmatpush1.msra.mxu0 %v1296
    %1399 = vmatprep.subr.mxu0 0.0
    %1400 = vmatpush1.msra.mxu0 %v1297
    %1401 = vmatprep.mubr.f32.mxu0 %v1263
    %1402 = vmatmul.mubr.f32.gmra.mrb[0].mxu0 %v1262
    %v1403 = vpop.f32.mrb[0].mxu0
    %v1404 = vadd.f32 %v1335, %v1403
    %v1405 = vpop.f32.mrb[0].mxu0
    %1406 = vdwg.mxu0
    %1407 = vmatprep.subr.mxu0 0.0
    %1408 = vmatpush1.msra.mxu0 %v1298
    %1409 = vmatprep.subr.mxu0 0.0
    %1410 = vmatpush1.msra.mxu0 %v1299
    %1411 = vmatprep.subr.mxu0 0.0
    %1412 = vmatpush1.msra.mxu0 %v1300
    %1413 = vmatprep.subr.mxu0 0.0
    %1414 = vmatpush1.msra.mxu0 %v1301
    %1415 = vmatprep.subr.mxu0 0.0
    %1416 = vmatpush1.msra.mxu0 %v1302
    %1417 = vmatprep.subr.mxu0 0.0
    %1418 = vmatpush1.msra.mxu0 %v1303
    %1419 = vmatprep.subr.mxu0 0.0
    %1420 = vmatpush1.msra.mxu0 %v1304
    %1421 = vmatprep.subr.mxu0 0.0
    %1422 = vmatpush1.msra.mxu0 %v1305
    %1423 = vmatprep.subr.mxu0 0.0
    %1424 = vmatpush1.msra.mxu0 %v1306
    %1425 = vmatprep.subr.mxu0 0.0
    %1426 = vmatpush1.msra.mxu0 %v1307
    %1427 = vmatprep.subr.mxu0 0.0
    %1428 = vmatpush1.msra.mxu0 %v1308
    %1429 = vmatprep.subr.mxu0 0.0
    %1430 = vmatpush1.msra.mxu0 %v1309
    %1431 = vmatprep.subr.mxu0 0.0
    %1432 = vmatpush1.msra.mxu0 %v1310
    %1433 = vmatprep.subr.mxu0 0.0
    %1434 = vmatpush1.msra.mxu0 %v1311
    %1435 = vmatprep.subr.mxu0 0.0
    %1436 = vmatpush1.msra.mxu0 %v1312
    %1437 = vmatprep.subr.mxu0 0.0
    %1438 = vmatpush1.msra.mxu0 %v1313
    %1439 = vmatprep.subr.mxu0 0.0
    %1440 = vmatpush1.msra.mxu0 %v1314
    %1441 = vmatprep.subr.mxu0 0.0
    %1442 = vmatpush1.msra.mxu0 %v1315
    %1443 = vmatprep.subr.mxu0 0.0
    %1444 = vmatpush1.msra.mxu0 %v1316
    %1445 = vmatprep.subr.mxu0 0.0
    %1446 = vmatpush1.msra.mxu0 %v1317
    %1447 = vmatprep.subr.mxu0 0.0
    %1448 = vmatpush1.msra.mxu0 %v1318
    %1449 = vmatprep.subr.mxu0 0.0
    %1450 = vmatpush1.msra.mxu0 %v1319
    %1451 = vmatprep.subr.mxu0 0.0
    %1452 = vmatpush1.msra.mxu0 %v1320
    %1453 = vmatprep.subr.mxu0 0.0
    %1454 = vmatpush1.msra.mxu0 %v1321
    %1455 = vmatprep.subr.mxu0 0.0
    %1456 = vmatpush1.msra.mxu0 %v1322
    %1457 = vmatprep.subr.mxu0 0.0
    %1458 = vmatpush1.msra.mxu0 %v1323
    %1459 = vmatprep.subr.mxu0 0.0
    %1460 = vmatpush1.msra.mxu0 %v1324
    %1461 = vmatprep.subr.mxu0 0.0
    %1462 = vmatpush1.msra.mxu0 %v1325
    %1463 = vmatprep.subr.mxu0 0.0
    %1464 = vmatpush1.msra.mxu0 %v1326
    %1465 = vmatprep.subr.mxu0 0.0
    %1466 = vmatpush1.msra.mxu0 %v1327
    %1467 = vmatprep.subr.mxu0 0.0
    %1468 = vmatpush1.msra.mxu0 %v1328
    %1469 = vmatprep.subr.mxu0 0.0
    %1470 = vmatpush1.msra.mxu0 %v1329
    %1471 = vmatprep.mubr.f32.mxu0 %v1265
    %1472 = vmatmul.mubr.f32.gmra.mrb[0].mxu0 %v1264
    %v1473 = vpop.f32.mrb[0].mxu0
    %v1474 = vadd.f32 %v1404, %v1473
    %v1475 = vpop.f32.mrb[0].mxu0
    %1476 = vdwg.mxu0
    %v1477 = vmax.f32 %v1474, 0.0
    %v1478 = vld [vmem:[#allocation11] sm:$0xff]
    %v1479 = vld [vmem:[#allocation11 + $0x8] sm:$0xff]
    %v1480 = vld [vmem:[#allocation11 + $0x10] sm:$0xff]
    %v1481 = vld [vmem:[#allocation11 + $0x18] sm:$0xff]
    %v1482 = vld [vmem:[#allocation11 + $0x20] sm:$0xff]
    %v1483 = vld [vmem:[#allocation11 + $0x28] sm:$0xff]
    %v1484 = vld [vmem:[#allocation11 + $0x30] sm:$0xff]
    %v1485 = vld [vmem:[#allocation11 + $0x38] sm:$0xff]
    %v1486 = vld [vmem:[#allocation11 + $0x40] sm:$0xff]
    %v1487 = vld [vmem:[#allocation11 + $0x48] sm:$0xff]
    %v1488 = vld [vmem:[#allocation11 + $0x50] sm:$0xff]
    %v1489 = vld [vmem:[#allocation11 + $0x58] sm:$0xff]
    %v1490 = vld [vmem:[#allocation11 + $0x60] sm:$0xff]
    %v1491 = vld [vmem:[#allocation11 + $0x68] sm:$0xff]
    %v1492 = vld [vmem:[#allocation11 + $0x70] sm:$0xff]
    %v1493 = vld [vmem:[#allocation11 + $0x78] sm:$0xff]
    %v1494 = vld [vmem:[#allocation11 + $0x80] sm:$0xff]
    %v1495 = vld [vmem:[#allocation11 + $0x88] sm:$0xff]
    %v1496 = vld [vmem:[#allocation11 + $0x90] sm:$0xff]
    %v1497 = vld [vmem:[#allocation11 + $0x98] sm:$0xff]
    %v1498 = vld [vmem:[#allocation11 + $0xa0] sm:$0xff]
    %v1499 = vld [vmem:[#allocation11 + $0xa8] sm:$0xff]
    %v1500 = vld [vmem:[#allocation11 + $0xb0] sm:$0xff]
    %v1501 = vld [vmem:[#allocation11 + $0xb8] sm:$0xff]
    %v1502 = vld [vmem:[#allocation11 + $0xc0] sm:$0xff]
    %v1503 = vld [vmem:[#allocation11 + $0xc8] sm:$0xff]
    %v1504 = vld [vmem:[#allocation11 + $0xd0] sm:$0xff]
    %v1505 = vld [vmem:[#allocation11 + $0xd8] sm:$0xff]
    %v1506 = vld [vmem:[#allocation11 + $0xe0] sm:$0xff]
    %v1507 = vld [vmem:[#allocation11 + $0xe8] sm:$0xff]
    %v1508 = vld [vmem:[#allocation11 + $0xf0] sm:$0xff]
    %v1509 = vld [vmem:[#allocation11 + $0xf8] sm:$0xff]
    %v1510 = vld [vmem:[#allocation13] sm:$0x3]
    %v1512 = vlaneseq
    %v1513 = vshrl.u32 %v1512, 7
    %v1514 = vsub.s32 0, %v1513
    %v1515 = vrot.slane %v1510, %v1514
    %v1516 = vlaneseq
    %v1517 = vshrl.u32 %v1516, 7
    %v1518 = vsub.s32 1, %v1517
    %v1519 = vrot.slane %v1510, %v1518
    %1522 = vmatprep.subr.mxu0 %v1479
    %1523 = vmatpush1.msra.mxu0 %v1478
    %1524 = vmatprep.subr.mxu0 %v1481
    %1525 = vmatpush1.msra.mxu0 %v1480
    %1526 = vmatprep.subr.mxu0 %v1483
    %1527 = vmatpush1.msra.mxu0 %v1482
    %1528 = vmatprep.subr.mxu0 %v1485
    %1529 = vmatpush1.msra.mxu0 %v1484
    %1530 = vmatprep.subr.mxu0 %v1487
    %1531 = vmatpush1.msra.mxu0 %v1486
    %1532 = vmatprep.subr.mxu0 %v1489
    %1533 = vmatpush1.msra.mxu0 %v1488
    %1534 = vmatprep.subr.mxu0 %v1491
    %1535 = vmatpush1.msra.mxu0 %v1490
    %1536 = vmatprep.subr.mxu0 %v1493
    %1537 = vmatpush1.msra.mxu0 %v1492
    %1538 = vmatprep.subr.mxu0 %v1495
    %1539 = vmatpush1.msra.mxu0 %v1494
    %1540 = vmatprep.subr.mxu0 %v1497
    %1541 = vmatpush1.msra.mxu0 %v1496
    %1542 = vmatprep.subr.mxu0 %v1499
    %1543 = vmatpush1.msra.mxu0 %v1498
    %1544 = vmatprep.subr.mxu0 %v1501
    %1545 = vmatpush1.msra.mxu0 %v1500
    %1546 = vmatprep.subr.mxu0 %v1503
    %1547 = vmatpush1.msra.mxu0 %v1502
    %1548 = vmatprep.subr.mxu0 %v1505
    %1549 = vmatpush1.msra.mxu0 %v1504
    %1550 = vmatprep.subr.mxu0 %v1507
    %1551 = vmatpush1.msra.mxu0 %v1506
    %1552 = vmatprep.subr.mxu0 %v1509
    %1553 = vmatpush1.msra.mxu0 %v1508
    %1554 = vmatprep.subr.mxu0 0.0
    %1555 = vmatpush1.msra.mxu0 0.0
    %1556 = vmatprep.subr.mxu0 0.0
    %1557 = vmatpush1.msra.mxu0 0.0
    %1558 = vmatprep.subr.mxu0 0.0
    %1559 = vmatpush1.msra.mxu0 0.0
    %1560 = vmatprep.subr.mxu0 0.0
    %1561 = vmatpush1.msra.mxu0 0.0
    %1562 = vmatprep.subr.mxu0 0.0
    %1563 = vmatpush1.msra.mxu0 0.0
    %1564 = vmatprep.subr.mxu0 0.0
    %1565 = vmatpush1.msra.mxu0 0.0
    %1566 = vmatprep.subr.mxu0 0.0
    %1567 = vmatpush1.msra.mxu0 0.0
    %1568 = vmatprep.subr.mxu0 0.0
    %1569 = vmatpush1.msra.mxu0 0.0
    %1570 = vmatprep.subr.mxu0 0.0
    %1571 = vmatpush1.msra.mxu0 0.0
    %1572 = vmatprep.subr.mxu0 0.0
    %1573 = vmatpush1.msra.mxu0 0.0
    %1574 = vmatprep.subr.mxu0 0.0
    %1575 = vmatpush1.msra.mxu0 0.0
    %1576 = vmatprep.subr.mxu0 0.0
    %1577 = vmatpush1.msra.mxu0 0.0
    %1578 = vmatprep.subr.mxu0 0.0
    %1579 = vmatpush1.msra.mxu0 0.0
    %1580 = vmatprep.subr.mxu0 0.0
    %1581 = vmatpush1.msra.mxu0 0.0
    %1582 = vmatprep.subr.mxu0 0.0
    %1583 = vmatpush1.msra.mxu0 0.0
    %1584 = vmatprep.subr.mxu0 0.0
    %1585 = vmatpush1.msra.mxu0 0.0
    %1586 = vmatprep.mubr.f32.mxu0 0.0
    %1587 = vmatmul.mubr.f32.gmra.mrb[0].mxu0 %v1477
    %v1588 = vpop.f32.mrb[0].mxu0
    %v1589 = vadd.f32 %v1515, %v1588
    %v1590 = vpop.f32.mrb[0].mxu0
    %v1591 = vadd.f32 %v1519, %v1590
    %1592 = vdwg.mxu0
    %v1595 = vcombine.low %v1589, %v1591
    %v1597 = vunpack.c.l.s4 1983009808
    %v1598 = vunpack.c.0.s8 %v1597
    %v1599 = vlaneseq
    %v1600 = vshrl.u32 %v1599, 7
    %v1601 = vsub.s32 %v1598, %v1600
    %v1602 = vrot.slane %v1595, %v1601
    %1604 = vst [vmem:[#allocation14] sm:$0xf] %v1602
    // Predicated region
    $region58: #{tpu_custom_call.1} parent=1 // pred_check
      _
    $region59: #{tpu_custom_call.1} parent=1 // pred_check_branch
      %1606 = sbr.rel (0) target = $region61
    $region60: #{tpu_custom_call.1} parent=1 // pred_region
      %s1608 = ssub.s32 64, 64
      %1609 = vsyncadd [#allocation4], %s1608
      %s1611 = sshll.u32 [#allocation14], 4
      %s1612 = int_to_ptr.vmem [resolvable:$true] %s1611
      %1614 = dma.vmem_to_hbm [thread:$0]  %s1612, 64, %s7, [#allocation4]
    $region61: #{tpu_custom_call.1} parent=1 // pred_fallthru
      _
    // Predicated region
    $region62: #{tpu_custom_call.1} parent=1 // pred_check
      _
    $region63: #{tpu_custom_call.1} parent=1 // pred_check_branch
      %1616 = sbr.rel (0) target = $region65
    $region64: #{tpu_custom_call.1} parent=1 // pred_region
      %1617 = dma.done [#allocation4], 64
    $region65: #{tpu_custom_call.1} parent=1 // pred_fallthru
      _
    %1618 = vsyncpa [#allocation3], 1
    %1619 = vsyncpa [#allocation6], 1
    %1620 = vsyncpa [#allocation9], 1
    %1621 = vsyncpa [#allocation12], 1
    %1622 = vsyncpa [#allocation4], 1

</llo_original>
